<compile_context>
chip_gen: v7x
topology: tpu7x:2x2x1
jax: 0.10.0
libtpu: 0.0.40
codegen_flags: <defaults>
</compile_context>

<pallas_src>
import math
import functools

import jax
import jax.numpy as jnp
from jax import lax
from jax.experimental import pallas as pl
from jax.experimental.pallas import tpu as pltpu


_NEG_BIG = -1e30  # finite "minus infinity": avoids exp(-inf - (-inf)) NaNs under tiling/padding


def _layernorm(x, scale, shift, eps=1e-5):
    # Single traversal of x: sum and sum-of-squares in one pass (halves XLU reduces).
    d = x.shape[-1]
    s1 = jnp.sum(x, axis=-1, keepdims=True)
    s2 = jnp.sum(x * x, axis=-1, keepdims=True)
    mean = s1 / d
    var = s2 / d - mean * mean            # unbiased=False, matches torch.var(unbiased=False)
    inv = lax.rsqrt(var + eps)            # EUP
    return (x - mean) * inv * scale + shift


def _gelu_tanh(x):
    c = math.sqrt(2.0 / math.pi)
    return 0.5 * x * (1.0 + jnp.tanh(c * (x + 0.044715 * x * x * x)))


def transformer_block_kernel(
    # inputs
    xq_ref, xkv_ref,
    wq_ref, wk_ref, wv_ref,
    wo_ref, bo_ref,
    w1_ref, b1_ref, w2_ref, b2_ref,
    g1_ref, s1_ref, g2_ref, s2_ref,
    # output
    o_ref,
    # scratch (persist across the KV grid axis)
    q_scr, m_scr, l_scr, acc_scr,
    *, num_heads, tq, tk,
):
    qi = pl.program_id(1)
    ki = pl.program_id(2)
    nk = pl.num_programs(2)

    D = xq_ref.shape[-1]
    hd = D // num_heads
    scale = 1.0 / math.sqrt(hd)

    # ---------------- per query-tile init (first KV step) ----------------
    @pl.when(ki == 0)
    def _init():
        m_scr[...] = jnp.full(m_scr.shape, _NEG_BIG, dtype=m_scr.dtype)
        l_scr[...] = jnp.zeros(l_scr.shape, dtype=l_scr.dtype)
        acc_scr[...] = jnp.zeros(acc_scr.shape, dtype=acc_scr.dtype)
        # norm1 + Q projection for this query tile, computed once and cached (scale folded in)
        xq = xq_ref[0]                                                    # (tq, D) f32
        hq = _layernorm(xq, g1_ref[...], s1_ref[...]).astype(jnp.bfloat16)
        q = jnp.dot(hq, wq_ref[...], preferred_element_type=jnp.float32) * scale
        q_scr[...] = q.astype(jnp.bfloat16)

    # ---------------- streamed causal attention over KV tiles ----------------
    kv_start = ki * tk
    q_last = qi * tq + (tq - 1)

    @pl.when(kv_start <= q_last)  # skip KV tiles strictly above the causal diagonal
    def _attend():
        xkv = xkv_ref[0]                                                  # (tk, D) f32
        hkv = _layernorm(xkv, g1_ref[...], s1_ref[...]).astype(jnp.bfloat16)
        k = jnp.dot(hkv, wk_ref[...], preferred_element_type=jnp.float32).astype(jnp.bfloat16)
        v = jnp.dot(hkv, wv_ref[...], preferred_element_type=jnp.float32).astype(jnp.bfloat16)
        q = q_scr[...]                                                    # (tq, D) bf16

        # Causal mask with global positions (hoisted out of the head loop). Only the
        # diagonal-straddling tiles actually have masked entries; strictly-below tiles are
        # unchanged by it, and strictly-above tiles were already skipped by pl.when above.
        qpos = qi * tq + lax.broadcasted_iota(jnp.int32, (tq, tk), 0)
        kpos = ki * tk + lax.broadcasted_iota(jnp.int32, (tq, tk), 1)
        masked = kpos > qpos

        for h in range(num_heads):                                        # static unroll
            sl = slice(h * hd, (h + 1) * hd)
            # contraction on the head dim: K consumed untransposed (no XLU transpose)
            s = lax.dot_general(q[:, sl], k[:, sl], (((1,), (1,)), ((), ())),
                                preferred_element_type=jnp.float32)       # (tq, tk)
            s = jnp.where(masked, _NEG_BIG, s)

            m_prev = m_scr[h]                                             # (tq, 1)
            m_new = jnp.maximum(m_prev, jnp.max(s, axis=-1, keepdims=True))
            alpha = jnp.exp(m_prev - m_new)
            p = jnp.exp(s - m_new)
            l_scr[h] = alpha * l_scr[h] + jnp.sum(p, axis=-1, keepdims=True)
            acc_scr[h] = alpha * acc_scr[h] + jnp.dot(
                p.astype(jnp.bfloat16), v[:, sl], preferred_element_type=jnp.float32)
            m_scr[h] = m_new
            # TODO(synk): attention dropout omitted (eval-mode identity).

    # ---------------- finalize: output proj, residuals, norm2, feed-forward ----------------
    @pl.when(ki == nk - 1)
    def _finalize():
        wo = wo_ref[...]                                                  # (D, D) bf16
        attn = jnp.zeros((tq, D), jnp.float32)
        for h in range(num_heads):
            inv_l = pl.reciprocal(l_scr[h], approx=True)                  # EUP; deferred softmax norm
            ctx_h = (acc_scr[h] * inv_l).astype(jnp.bfloat16)             # (tq, hd)
            # accumulate the output projection per head (slices Wo on the sublane axis),
            # so the per-head contexts are never concatenated.
            attn = attn + jnp.dot(ctx_h, wo[h * hd:(h + 1) * hd, :],
                                  preferred_element_type=jnp.float32)
        attn = attn + bo_ref[...]

        x1 = xq_ref[0] + attn                                             # residual 1 (f32)
        # TODO(synk): shortcut dropout omitted (eval-mode identity).

        h2 = _layernorm(x1, g2_ref[...], s2_ref[...]).astype(jnp.bfloat16)
        ff = jnp.dot(h2, w1_ref[...], preferred_element_type=jnp.float32) + b1_ref[...]
        ff = _gelu_tanh(ff).astype(jnp.bfloat16)
        ff = jnp.dot(ff, w2_ref[...], preferred_element_type=jnp.float32) + b2_ref[...]

        o_ref[0] = (x1 + ff).astype(o_ref.dtype)                          # residual 2


def transformer_block(x, params, num_heads, *, tq=None, tk=None):
    B, T, D = x.shape
    H = 4 * D
    assert D % num_heads == 0
    hd = D // num_heads

    tq = min(128, T) if tq is None else tq
    tk = min(128, T) if tk is None else tk
    assert T % tq == 0 and T % tk == 0, "T must be divisible by the tile sizes"
    # TODO(synk): ragged sequence lengths (tail-tile padding + masking) not implemented.

    bf16 = jnp.bfloat16
    # Pass the matmul weights as bf16: MXU-native on v5e/v6e/v7x, halves weight DMA bytes
    # and the double-buffered VMEM footprint. Biases / LayerNorm params stay f32.
    wq, wk, wv = (params[n].astype(bf16) for n in ("wq", "wk", "wv"))
    wo = params["wo"].astype(bf16)
    w1 = params["w1"].astype(bf16)
    w2 = params["w2"].astype(bf16)

    def full2d(shape):
        return pl.BlockSpec(shape, lambda b, qi, ki: (0, 0))

    in_specs = [
        pl.BlockSpec((1, tq, D), lambda b, qi, ki: (b, qi, 0)),   # x: query / residual tile
        pl.BlockSpec((1, tk, D), lambda b, qi, ki: (b, ki, 0)),   # x: key/value tile
        full2d((D, D)), full2d((D, D)), full2d((D, D)),           # Wq, Wk, Wv   (bf16)
        full2d((D, D)), full2d((1, D)),                           # Wo (bf16), bo
        full2d((D, H)), full2d((1, H)),                           # W1 (bf16), b1
        full2d((H, D)), full2d((1, D)),                           # W2 (bf16), b2
        full2d((1, D)), full2d((1, D)),                           # norm1 scale, shift
        full2d((1, D)), full2d((1, D)),                           # norm2 scale, shift
    ]

    kernel = functools.partial(transformer_block_kernel, num_heads=num_heads, tq=tq, tk=tk)

    # Advisory cost hint for the XLA scheduler (causal halving ignored -> upper bound).
    flops = B * (3 * 2 * T * D * D          # QKV projections
                 + 2 * 2 * T * T * D        # scores + P@V
                 + 2 * T * D * D            # output projection
                 + 2 * 2 * T * D * H)       # feed-forward
    transcendentals = B * (num_heads * T * T + T * H)
    bytes_accessed = (3 * B * T * D * 4                     # x read twice + output written
                      + 2 * (4 * D * D + 2 * D * H)         # bf16 weights
                      + 4 * (6 * D + H))                    # biases + LN params (f32)
    cost = pl.CostEstimate(flops=int(flops), transcendentals=int(transcendentals),
                           bytes_accessed=int(bytes_accessed))

    return pl.pallas_call(
        kernel,
        out_shape=jax.ShapeDtypeStruct((B, T, D), x.dtype),
        grid_spec=pltpu.PrefetchScalarGridSpec(
            num_scalar_prefetch=0,
            grid=(B, T // tq, T // tk),
            in_specs=in_specs,
            out_specs=pl.BlockSpec((1, tq, D), lambda b, qi, ki: (b, qi, 0)),
            scratch_shapes=[
                pltpu.VMEM((tq, D), jnp.bfloat16),            # cached (scaled) Q tile
                pltpu.VMEM((num_heads, tq, 1), jnp.float32),  # running max   (online softmax)
                pltpu.VMEM((num_heads, tq, 1), jnp.float32),  # running denom (online softmax)
                pltpu.VMEM((num_heads, tq, hd), jnp.float32), # output accumulator
            ],
        ),
        compiler_params=pltpu.CompilerParams(
            dimension_semantics=("parallel", "parallel", "arbitrary"),
            vmem_limit_bytes=32 * 1024 * 1024,
        ),
        cost_estimate=cost,
    )(
        x, x,
        wq, wk, wv, wo, params["bo"],
        w1, params["b1"], w2, params["b2"],
        params["g1"], params["s1"], params["g2"], params["s2"],
    )


def reference_block(x, params, num_heads):
    """Pure-JAX f32 reference mirroring the PyTorch forward (eval mode)."""
    B, T, D = x.shape
    hd = D // num_heads

    def ln(z, g, s):
        mu = z.mean(-1, keepdims=True)
        var = ((z - mu) ** 2).mean(-1, keepdims=True)
        return (z - mu) / jnp.sqrt(var + 1e-5) * g + s

    h = ln(x, params["g1"], params["s1"])
    q = h @ params["wq"]
    k = h @ params["wk"]
    v = h @ params["wv"]
    q = q.reshape(B, T, num_heads, hd).transpose(0, 2, 1, 3)
    k = k.reshape(B, T, num_heads, hd).transpose(0, 2, 1, 3)
    v = v.reshape(B, T, num_heads, hd).transpose(0, 2, 1, 3)
    scores = jnp.einsum("bhqd,bhkd->bhqk", q, k) / math.sqrt(hd)
    mask = jnp.triu(jnp.ones((T, T), bool), k=1)
    scores = jnp.where(mask, -jnp.inf, scores)
    w = jax.nn.softmax(scores, axis=-1)
    ctx = jnp.einsum("bhqk,bhkd->bhqd", w, v).transpose(0, 2, 1, 3).reshape(B, T, D)
    attn = ctx @ params["wo"] + params["bo"]
    x = x + attn
    h2 = ln(x, params["g2"], params["s2"])
    ff = h2 @ params["w1"] + params["b1"]
    c = math.sqrt(2.0 / math.pi)
    ff = 0.5 * ff * (1.0 + jnp.tanh(c * (ff + 0.044715 * ff ** 3)))
    ff = ff @ params["w2"] + params["b2"]
    return x + ff


if __name__ == "__main__":
    B, T, D, n_heads = 2, 16, 32, 4
    H = 4 * D

    keys = jax.random.split(jax.random.PRNGKey(0), 9)

    params = {
        "wq": 0.05 * jax.random.normal(keys[0], (D, D), jnp.float32),
        "wk": 0.05 * jax.random.normal(keys[1], (D, D), jnp.float32),
        "wv": 0.05 * jax.random.normal(keys[2], (D, D), jnp.float32),
        "wo": 0.05 * jax.random.normal(keys[3], (D, D), jnp.float32),
        "bo": 0.01 * jax.random.normal(keys[4], (1, D), jnp.float32),
        "w1": 0.05 * jax.random.normal(keys[5], (D, H), jnp.float32),
        "b1": 0.01 * jax.random.normal(keys[6], (1, H), jnp.float32),
        "w2": 0.05 * jax.random.normal(keys[7], (H, D), jnp.float32),
        "b2": jnp.zeros((1, D), jnp.float32),
        "g1": jnp.ones((1, D), jnp.float32),
        "s1": jnp.zeros((1, D), jnp.float32),
        "g2": jnp.ones((1, D), jnp.float32),
        "s2": jnp.zeros((1, D), jnp.float32),
    }

    x = jax.random.normal(keys[8], (B, T, D), jnp.float32)

    # Small tiles so the flash pipeline (multiple KV steps, causal skipping, online softmax)
    # is actually exercised: grid = (2, 2, 2).
    out = transformer_block(x, params, n_heads, tq=8, tk=8)
    out = jax.block_until_ready(out)

    ref = reference_block(x, params, n_heads)
    assert out.shape == (B, T, D)
    # bf16 MXU operands with f32 accumulation -> relaxed tolerance vs the f32 reference.
    assert jnp.allclose(out, ref, atol=5e-2, rtol=5e-2), "mismatch vs reference"

    print("KERNEL_OK")
</pallas_src>

<mosaic_0001>
module attributes {stable_mosaic.version = 11 : i64} {
  func.func @transformer_block_kernel(%arg0: i32, %arg1: i32, %arg2: i32, %arg3: memref<1x8x32xf32, #tpu.memory_space<vmem>>, %arg4: memref<1x8x32xf32, #tpu.memory_space<vmem>>, %arg5: memref<32x32xbf16, #tpu.memory_space<vmem>>, %arg6: memref<32x32xbf16, #tpu.memory_space<vmem>>, %arg7: memref<32x32xbf16, #tpu.memory_space<vmem>>, %arg8: memref<32x32xbf16, #tpu.memory_space<vmem>>, %arg9: memref<1x32xf32, #tpu.memory_space<vmem>>, %arg10: memref<32x128xbf16, #tpu.memory_space<vmem>>, %arg11: memref<1x128xf32, #tpu.memory_space<vmem>>, %arg12: memref<128x32xbf16, #tpu.memory_space<vmem>>, %arg13: memref<1x32xf32, #tpu.memory_space<vmem>>, %arg14: memref<1x32xf32, #tpu.memory_space<vmem>>, %arg15: memref<1x32xf32, #tpu.memory_space<vmem>>, %arg16: memref<1x32xf32, #tpu.memory_space<vmem>>, %arg17: memref<1x32xf32, #tpu.memory_space<vmem>>, %arg18: memref<1x8x32xf32, #tpu.memory_space<vmem>>, %arg19: memref<8x32xbf16, #tpu.memory_space<vmem>>, %arg20: memref<4x8x1xf32, #tpu.memory_space<vmem>>, %arg21: memref<4x8x1xf32, #tpu.memory_space<vmem>>, %arg22: memref<4x8x8xf32, #tpu.memory_space<vmem>>) attributes {dimension_semantics = [#tpu.dimension_semantics<parallel>, #tpu.dimension_semantics<parallel>, #tpu.dimension_semantics<arbitrary>], iteration_bounds = array<i64: 2, 2, 2>, scalar_prefetch = 0 : i64, scratch_operands = 4 : i64, tpu.core_type = #tpu.core_type<tc>, window_params = [{transform_indices = @transform_0, window_bounds = array<i64: 1, 8, 32>}, {transform_indices = @transform_1, window_bounds = array<i64: 1, 8, 32>}, {pipeline_mode = #tpu.pipeline_mode<synchronous>, transform_indices = @transform_2, window_bounds = array<i64: 32, 32>}, {pipeline_mode = #tpu.pipeline_mode<synchronous>, transform_indices = @transform_3, window_bounds = array<i64: 32, 32>}, {pipeline_mode = #tpu.pipeline_mode<synchronous>, transform_indices = @transform_4, window_bounds = array<i64: 32, 32>}, {pipeline_mode = #tpu.pipeline_mode<synchronous>, transform_indices = @transform_5, window_bounds = array<i64: 32, 32>}, {pipeline_mode = #tpu.pipeline_mode<synchronous>, transform_indices = @transform_6, window_bounds = array<i64: 1, 32>}, {pipeline_mode = #tpu.pipeline_mode<synchronous>, transform_indices = @transform_7, window_bounds = array<i64: 32, 128>}, {pipeline_mode = #tpu.pipeline_mode<synchronous>, transform_indices = @transform_8, window_bounds = array<i64: 1, 128>}, {pipeline_mode = #tpu.pipeline_mode<synchronous>, transform_indices = @transform_9, window_bounds = array<i64: 128, 32>}, {pipeline_mode = #tpu.pipeline_mode<synchronous>, transform_indices = @transform_10, window_bounds = array<i64: 1, 32>}, {pipeline_mode = #tpu.pipeline_mode<synchronous>, transform_indices = @transform_11, window_bounds = array<i64: 1, 32>}, {pipeline_mode = #tpu.pipeline_mode<synchronous>, transform_indices = @transform_12, window_bounds = array<i64: 1, 32>}, {pipeline_mode = #tpu.pipeline_mode<synchronous>, transform_indices = @transform_13, window_bounds = array<i64: 1, 32>}, {pipeline_mode = #tpu.pipeline_mode<synchronous>, transform_indices = @transform_14, window_bounds = array<i64: 1, 32>}, {transform_indices = @transform_15, window_bounds = array<i64: 1, 8, 32>}]} {
    %c0_i32 = arith.constant 0 : i32
    %0 = arith.cmpi eq, %arg2, %c0_i32 : i32
    %1 = arith.extui %0 : i1 to i32
    %c0_i32_0 = arith.constant 0 : i32
    %2 = arith.cmpi ne, %1, %c0_i32_0 : i32
    scf.if %2 {
      %cst = arith.constant -1.000000e+30 : f32
      %12 = vector.broadcast %cst : f32 to vector<4x8x1xf32>
      %c0 = arith.constant 0 : index
      %c0_4 = arith.constant 0 : index
      %c0_5 = arith.constant 0 : index
      %13 = vector.load %arg20[%c0, %c0_4, %c0_5] : memref<4x8x1xf32, #tpu.memory_space<vmem>>, vector<4x8x1xf32>
      tpu.vector_store %arg20[%c0, %c0_4, %c0_5], %12 {strides = array<i32>} : memref<4x8x1xf32, #tpu.memory_space<vmem>>, vector<4x8x1xf32>,
      %cst_6 = arith.constant 0.000000e+00 : f32
      %14 = vector.broadcast %cst_6 : f32 to vector<4x8x1xf32>
      %c0_7 = arith.constant 0 : index
      %c0_8 = arith.constant 0 : index
      %c0_9 = arith.constant 0 : index
      %15 = vector.load %arg21[%c0_7, %c0_8, %c0_9] : memref<4x8x1xf32, #tpu.memory_space<vmem>>, vector<4x8x1xf32>
      tpu.vector_store %arg21[%c0_7, %c0_8, %c0_9], %14 {strides = array<i32>} : memref<4x8x1xf32, #tpu.memory_space<vmem>>, vector<4x8x1xf32>,
      %cst_10 = arith.constant 0.000000e+00 : f32
      %16 = vector.broadcast %cst_10 : f32 to vector<4x8x8xf32>
      %c0_11 = arith.constant 0 : index
      %c0_12 = arith.constant 0 : index
      %c0_13 = arith.constant 0 : index
      %17 = vector.load %arg22[%c0_11, %c0_12, %c0_13] : memref<4x8x8xf32, #tpu.memory_space<vmem>>, vector<4x8x8xf32>
      tpu.vector_store %arg22[%c0_11, %c0_12, %c0_13], %16 {strides = array<i32>} : memref<4x8x8xf32, #tpu.memory_space<vmem>>, vector<4x8x8xf32>,
      %c0_14 = arith.constant 0 : index
      %c0_15 = arith.constant 0 : index
      %c0_16 = arith.constant 0 : index
      %18 = vector.load %arg3[%c0_14, %c0_15, %c0_16] : memref<1x8x32xf32, #tpu.memory_space<vmem>>, vector<1x8x32xf32>
      %19 = vector.shape_cast %18 : vector<1x8x32xf32> to vector<8x32xf32>
      %c0_17 = arith.constant 0 : index
      %c0_18 = arith.constant 0 : index
      %20 = vector.load %arg14[%c0_17, %c0_18] : memref<1x32xf32, #tpu.memory_space<vmem>>, vector<1x32xf32>
      %c0_19 = arith.constant 0 : index
      %c0_20 = arith.constant 0 : index
      %21 = vector.load %arg15[%c0_19, %c0_20] : memref<1x32xf32, #tpu.memory_space<vmem>>, vector<1x32xf32>
      %cst_21 = arith.constant dense<0.000000e+00> : vector<8xf32>
      %22 = vector.multi_reduction <add>, %19, %cst_21 [1] : vector<8x32xf32> to vector<8xf32>
      %23 = vector.shape_cast %22 : vector<8xf32> to vector<8x1xf32>
      %24 = arith.mulf %19, %19 : vector<8x32xf32>
      %cst_22 = arith.constant dense<0.000000e+00> : vector<8xf32>
      %25 = vector.multi_reduction <add>, %24, %cst_22 [1] : vector<8x32xf32> to vector<8xf32>
      %26 = vector.shape_cast %25 : vector<8xf32> to vector<8x1xf32>
      %cst_23 = arith.constant 3.200000e+01 : f32
      %27 = vector.broadcast %cst_23 : f32 to vector<8x1xf32>
      %28 = arith.divf %23, %27 : vector<8x1xf32>
      %cst_24 = arith.constant 3.200000e+01 : f32
      %29 = vector.broadcast %cst_24 : f32 to vector<8x1xf32>
      %30 = arith.divf %26, %29 : vector<8x1xf32>
      %31 = arith.mulf %28, %28 : vector<8x1xf32>
      %32 = arith.subf %30, %31 : vector<8x1xf32>
      %cst_25 = arith.constant 9.99999974E-6 : f32
      %33 = vector.broadcast %cst_25 : f32 to vector<8x1xf32>
      %34 = arith.addf %32, %33 : vector<8x1xf32>
      %35 = math.rsqrt %34 : vector<8x1xf32>
      %36 = vector.broadcast %28 : vector<8x1xf32> to vector<8x32xf32>
      %37 = arith.subf %19, %36 : vector<8x32xf32>
      %38 = vector.broadcast %35 : vector<8x1xf32> to vector<8x32xf32>
      %39 = arith.mulf %37, %38 : vector<8x32xf32>
      %40 = vector.broadcast %20 : vector<1x32xf32> to vector<8x32xf32>
      %41 = arith.mulf %39, %40 : vector<8x32xf32>
      %42 = vector.broadcast %21 : vector<1x32xf32> to vector<8x32xf32>
      %43 = arith.addf %41, %42 : vector<8x32xf32>
      %44 = arith.truncf %43 : vector<8x32xf32> to vector<8x32xbf16>
      %c0_26 = arith.constant 0 : index
      %c0_27 = arith.constant 0 : index
      %45 = vector.load %arg5[%c0_26, %c0_27] : memref<32x32xbf16, #tpu.memory_space<vmem>>, vector<32x32xbf16>
      %cst_28 = arith.constant dense<0.000000e+00> : vector<8x32xf32>
      %46 = tpu.matmul %44, %45, %cst_28 {dimension_numbers = #tpu.dot_dimension_numbers<[1], [0], [0], [1], [0, 0, 1, 1], [], []>} : vector<8x32xbf16>, vector<32x32xbf16>, vector<8x32xf32> -> vector<8x32xf32>
      %cst_29 = arith.constant 0.353553385 : f32
      %47 = vector.broadcast %cst_29 : f32 to vector<8x32xf32>
      %48 = arith.mulf %46, %47 : vector<8x32xf32>
      %49 = arith.truncf %48 : vector<8x32xf32> to vector<8x32xbf16>
      %c0_30 = arith.constant 0 : index
      %c0_31 = arith.constant 0 : index
      %50 = vector.load %arg19[%c0_30, %c0_31] : memref<8x32xbf16, #tpu.memory_space<vmem>>, vector<8x32xbf16>
      tpu.vector_store %arg19[%c0_30, %c0_31], %49 {strides = array<i32>} : memref<8x32xbf16, #tpu.memory_space<vmem>>, vector<8x32xbf16>,
    } else {
    }
    %c8_i32 = arith.constant 8 : i32
    %3 = arith.muli %arg2, %c8_i32 : i32
    %c8_i32_1 = arith.constant 8 : i32
    %4 = arith.muli %arg1, %c8_i32_1 : i32
    %c7_i32 = arith.constant 7 : i32
    %5 = arith.addi %4, %c7_i32 : i32
    %6 = arith.cmpi sle, %3, %5 : i32
    %7 = arith.extui %6 : i1 to i32
    %c0_i32_2 = arith.constant 0 : i32
    %8 = arith.cmpi ne, %7, %c0_i32_2 : i32
    scf.if %8 {
      %c0 = arith.constant 0 : index
      %c0_4 = arith.constant 0 : index
      %c0_5 = arith.constant 0 : index
      %12 = vector.load %arg4[%c0, %c0_4, %c0_5] : memref<1x8x32xf32, #tpu.memory_space<vmem>>, vector<1x8x32xf32>
      %13 = vector.shape_cast %12 : vector<1x8x32xf32> to vector<8x32xf32>
      %c0_6 = arith.constant 0 : index
      %c0_7 = arith.constant 0 : index
      %14 = vector.load %arg14[%c0_6, %c0_7] : memref<1x32xf32, #tpu.memory_space<vmem>>, vector<1x32xf32>
      %c0_8 = arith.constant 0 : index
      %c0_9 = arith.constant 0 : index
      %15 = vector.load %arg15[%c0_8, %c0_9] : memref<1x32xf32, #tpu.memory_space<vmem>>, vector<1x32xf32>
      %cst = arith.constant dense<0.000000e+00> : vector<8xf32>
      %16 = vector.multi_reduction <add>, %13, %cst [1] : vector<8x32xf32> to vector<8xf32>
      %17 = vector.shape_cast %16 : vector<8xf32> to vector<8x1xf32>
      %18 = arith.mulf %13, %13 : vector<8x32xf32>
      %cst_10 = arith.constant dense<0.000000e+00> : vector<8xf32>
      %19 = vector.multi_reduction <add>, %18, %cst_10 [1] : vector<8x32xf32> to vector<8xf32>
      %20 = vector.shape_cast %19 : vector<8xf32> to vector<8x1xf32>
      %cst_11 = arith.constant 3.200000e+01 : f32
      %21 = vector.broadcast %cst_11 : f32 to vector<8x1xf32>
      %22 = arith.divf %17, %21 : vector<8x1xf32>
      %cst_12 = arith.constant 3.200000e+01 : f32
      %23 = vector.broadcast %cst_12 : f32 to vector<8x1xf32>
      %24 = arith.divf %20, %23 : vector<8x1xf32>
      %25 = arith.mulf %22, %22 : vector<8x1xf32>
      %26 = arith.subf %24, %25 : vector<8x1xf32>
      %cst_13 = arith.constant 9.99999974E-6 : f32
      %27 = vector.broadcast %cst_13 : f32 to vector<8x1xf32>
      %28 = arith.addf %26, %27 : vector<8x1xf32>
      %29 = math.rsqrt %28 : vector<8x1xf32>
      %30 = vector.broadcast %22 : vector<8x1xf32> to vector<8x32xf32>
      %31 = arith.subf %13, %30 : vector<8x32xf32>
      %32 = vector.broadcast %29 : vector<8x1xf32> to vector<8x32xf32>
      %33 = arith.mulf %31, %32 : vector<8x32xf32>
      %34 = vector.broadcast %14 : vector<1x32xf32> to vector<8x32xf32>
      %35 = arith.mulf %33, %34 : vector<8x32xf32>
      %36 = vector.broadcast %15 : vector<1x32xf32> to vector<8x32xf32>
      %37 = arith.addf %35, %36 : vector<8x32xf32>
      %38 = arith.truncf %37 : vector<8x32xf32> to vector<8x32xbf16>
      %c0_14 = arith.constant 0 : index
      %c0_15 = arith.constant 0 : index
      %39 = vector.load %arg6[%c0_14, %c0_15] : memref<32x32xbf16, #tpu.memory_space<vmem>>, vector<32x32xbf16>
      %cst_16 = arith.constant dense<0.000000e+00> : vector<8x32xf32>
      %40 = tpu.matmul %38, %39, %cst_16 {dimension_numbers = #tpu.dot_dimension_numbers<[1], [0], [0], [1], [0, 0, 1, 1], [], []>} : vector<8x32xbf16>, vector<32x32xbf16>, vector<8x32xf32> -> vector<8x32xf32>
      %41 = arith.truncf %40 : vector<8x32xf32> to vector<8x32xbf16>
      %c0_17 = arith.constant 0 : index
      %c0_18 = arith.constant 0 : index
      %42 = vector.load %arg7[%c0_17, %c0_18] : memref<32x32xbf16, #tpu.memory_space<vmem>>, vector<32x32xbf16>
      %cst_19 = arith.constant dense<0.000000e+00> : vector<8x32xf32>
      %43 = tpu.matmul %38, %42, %cst_19 {dimension_numbers = #tpu.dot_dimension_numbers<[1], [0], [0], [1], [0, 0, 1, 1], [], []>} : vector<8x32xbf16>, vector<32x32xbf16>, vector<8x32xf32> -> vector<8x32xf32>
      %44 = arith.truncf %43 : vector<8x32xf32> to vector<8x32xbf16>
      %c0_20 = arith.constant 0 : index
      %c0_21 = arith.constant 0 : index
      %45 = vector.load %arg19[%c0_20, %c0_21] : memref<8x32xbf16, #tpu.memory_space<vmem>>, vector<8x32xbf16>
      %c8_i32_22 = arith.constant 8 : i32
      %46 = arith.muli %arg1, %c8_i32_22 : i32
      %47 = tpu.iota {dimensions = array<i32: 0>} : vector<8x8xi32>
      %48 = vector.broadcast %46 : i32 to vector<8x8xi32>
      %49 = arith.addi %48, %47 : vector<8x8xi32>
      %c8_i32_23 = arith.constant 8 : i32
      %50 = arith.muli %arg2, %c8_i32_23 : i32
      %51 = tpu.iota {dimensions = array<i32: 1>} : vector<8x8xi32>
      %52 = vector.broadcast %50 : i32 to vector<8x8xi32>
      %53 = arith.addi %52, %51 : vector<8x8xi32>
      %54 = arith.cmpi sgt, %53, %49 : vector<8x8xi32>
      %55 = vector.extract_strided_slice %45 {offsets = [0, 0], sizes = [8, 8], strides = [1, 1]} : vector<8x32xbf16> to vector<8x8xbf16>
      %56 = vector.extract_strided_slice %41 {offsets = [0, 0], sizes = [8, 8], strides = [1, 1]} : vector<8x32xbf16> to vector<8x8xbf16>
      %cst_24 = arith.constant dense<0.000000e+00> : vector<8x8xf32>
      %57 = tpu.matmul %55, %56, %cst_24 {dimension_numbers = #tpu.dot_dimension_numbers<[1], [1], [0], [0], [0, 0, 1, 0], [], []>} : vector<8x8xbf16>, vector<8x8xbf16>, vector<8x8xf32> -> vector<8x8xf32>
      %cst_25 = arith.constant -1.000000e+30 : f32
      %58 = vector.broadcast %cst_25 : f32 to vector<8x8xf32>
      %59 = arith.select %54, %58, %57 : vector<8x8xi1>, vector<8x8xf32>
      %c0_26 = arith.constant 0 : index
      %c0_27 = arith.constant 0 : index
      %c0_28 = arith.constant 0 : index
      %60 = vector.load %arg20[%c0_26, %c0_27, %c0_28] : memref<4x8x1xf32, #tpu.memory_space<vmem>>, vector<1x8x1xf32>
      %61 = vector.shape_cast %60 : vector<1x8x1xf32> to vector<8x1xf32>
      %cst_29 = arith.constant dense<0xFF800000> : vector<8xf32>
      %62 = vector.multi_reduction <maximumf>, %59, %cst_29 [1] : vector<8x8xf32> to vector<8xf32>
      %63 = vector.shape_cast %62 : vector<8xf32> to vector<8x1xf32>
      %64 = arith.maximumf %61, %63 : vector<8x1xf32>
      %65 = arith.subf %61, %64 : vector<8x1xf32>
      %66 = math.exp %65 : vector<8x1xf32>
      %67 = vector.broadcast %64 : vector<8x1xf32> to vector<8x8xf32>
      %68 = arith.subf %59, %67 : vector<8x8xf32>
      %69 = math.exp %68 : vector<8x8xf32>
      %c0_30 = arith.constant 0 : index
      %c0_31 = arith.constant 0 : index
      %c0_32 = arith.constant 0 : index
      %70 = vector.load %arg21[%c0_30, %c0_31, %c0_32] : memref<4x8x1xf32, #tpu.memory_space<vmem>>, vector<1x8x1xf32>
      %71 = vector.shape_cast %70 : vector<1x8x1xf32> to vector<8x1xf32>
      %72 = arith.mulf %66, %71 : vector<8x1xf32>
      %cst_33 = arith.constant dense<0.000000e+00> : vector<8xf32>
      %73 = vector.multi_reduction <add>, %69, %cst_33 [1] : vector<8x8xf32> to vector<8xf32>
      %74 = vector.shape_cast %73 : vector<8xf32> to vector<8x1xf32>
      %75 = arith.addf %72, %74 : vector<8x1xf32>
      %c0_34 = arith.constant 0 : index
      %c0_35 = arith.constant 0 : index
      %c0_36 = arith.constant 0 : index
      %76 = vector.load %arg21[%c0_34, %c0_35, %c0_36] : memref<4x8x1xf32, #tpu.memory_space<vmem>>, vector<1x8x1xf32>
      %77 = vector.shape_cast %76 : vector<1x8x1xf32> to vector<8x1xf32>
      %78 = vector.shape_cast %75 : vector<8x1xf32> to vector<1x8x1xf32>
      tpu.vector_store %arg21[%c0_34, %c0_35, %c0_36], %78 {strides = array<i32>} : memref<4x8x1xf32, #tpu.memory_space<vmem>>, vector<1x8x1xf32>,
      %c0_37 = arith.constant 0 : index
      %c0_38 = arith.constant 0 : index
      %c0_39 = arith.constant 0 : index
      %79 = vector.load %arg22[%c0_37, %c0_38, %c0_39] : memref<4x8x8xf32, #tpu.memory_space<vmem>>, vector<1x8x8xf32>
      %80 = vector.shape_cast %79 : vector<1x8x8xf32> to vector<8x8xf32>
      %81 = vector.broadcast %66 : vector<8x1xf32> to vector<8x8xf32>
      %82 = arith.mulf %81, %80 : vector<8x8xf32>
      %83 = arith.truncf %69 : vector<8x8xf32> to vector<8x8xbf16>
      %84 = vector.extract_strided_slice %44 {offsets = [0, 0], sizes = [8, 8], strides = [1, 1]} : vector<8x32xbf16> to vector<8x8xbf16>
      %cst_40 = arith.constant dense<0.000000e+00> : vector<8x8xf32>
      %85 = tpu.matmul %83, %84, %cst_40 {dimension_numbers = #tpu.dot_dimension_numbers<[1], [0], [0], [1], [0, 0, 1, 1], [], []>} : vector<8x8xbf16>, vector<8x8xbf16>, vector<8x8xf32> -> vector<8x8xf32>
      %86 = arith.addf %82, %85 : vector<8x8xf32>
      %c0_41 = arith.constant 0 : index
      %c0_42 = arith.constant 0 : index
      %c0_43 = arith.constant 0 : index
      %87 = vector.load %arg22[%c0_41, %c0_42, %c0_43] : memref<4x8x8xf32, #tpu.memory_space<vmem>>, vector<1x8x8xf32>
      %88 = vector.shape_cast %87 : vector<1x8x8xf32> to vector<8x8xf32>
      %89 = vector.shape_cast %86 : vector<8x8xf32> to vector<1x8x8xf32>
      tpu.vector_store %arg22[%c0_41, %c0_42, %c0_43], %89 {strides = array<i32>} : memref<4x8x8xf32, #tpu.memory_space<vmem>>, vector<1x8x8xf32>,
      %c0_44 = arith.constant 0 : index
      %c0_45 = arith.constant 0 : index
      %c0_46 = arith.constant 0 : index
      %90 = vector.load %arg20[%c0_44, %c0_45, %c0_46] : memref<4x8x1xf32, #tpu.memory_space<vmem>>, vector<1x8x1xf32>
      %91 = vector.shape_cast %90 : vector<1x8x1xf32> to vector<8x1xf32>
      %92 = vector.shape_cast %64 : vector<8x1xf32> to vector<1x8x1xf32>
      tpu.vector_store %arg20[%c0_44, %c0_45, %c0_46], %92 {strides = array<i32>} : memref<4x8x1xf32, #tpu.memory_space<vmem>>, vector<1x8x1xf32>,
      %93 = vector.extract_strided_slice %45 {offsets = [0, 8], sizes = [8, 8], strides = [1, 1]} : vector<8x32xbf16> to vector<8x8xbf16>
      %94 = vector.extract_strided_slice %41 {offsets = [0, 8], sizes = [8, 8], strides = [1, 1]} : vector<8x32xbf16> to vector<8x8xbf16>
      %cst_47 = arith.constant dense<0.000000e+00> : vector<8x8xf32>
      %95 = tpu.matmul %93, %94, %cst_47 {dimension_numbers = #tpu.dot_dimension_numbers<[1], [1], [0], [0], [0, 0, 1, 0], [], []>} : vector<8x8xbf16>, vector<8x8xbf16>, vector<8x8xf32> -> vector<8x8xf32>
      %cst_48 = arith.constant -1.000000e+30 : f32
      %96 = vector.broadcast %cst_48 : f32 to vector<8x8xf32>
      %97 = arith.select %54, %96, %95 : vector<8x8xi1>, vector<8x8xf32>
      %c1 = arith.constant 1 : index
      %c0_49 = arith.constant 0 : index
      %c0_50 = arith.constant 0 : index
      %98 = vector.load %arg20[%c1, %c0_49, %c0_50] : memref<4x8x1xf32, #tpu.memory_space<vmem>>, vector<1x8x1xf32>
      %99 = vector.shape_cast %98 : vector<1x8x1xf32> to vector<8x1xf32>
      %cst_51 = arith.constant dense<0xFF800000> : vector<8xf32>
      %100 = vector.multi_reduction <maximumf>, %97, %cst_51 [1] : vector<8x8xf32> to vector<8xf32>
      %101 = vector.shape_cast %100 : vector<8xf32> to vector<8x1xf32>
      %102 = arith.maximumf %99, %101 : vector<8x1xf32>
      %103 = arith.subf %99, %102 : vector<8x1xf32>
      %104 = math.exp %103 : vector<8x1xf32>
      %105 = vector.broadcast %102 : vector<8x1xf32> to vector<8x8xf32>
      %106 = arith.subf %97, %105 : vector<8x8xf32>
      %107 = math.exp %106 : vector<8x8xf32>
      %c1_52 = arith.constant 1 : index
      %c0_53 = arith.constant 0 : index
      %c0_54 = arith.constant 0 : index
      %108 = vector.load %arg21[%c1_52, %c0_53, %c0_54] : memref<4x8x1xf32, #tpu.memory_space<vmem>>, vector<1x8x1xf32>
      %109 = vector.shape_cast %108 : vector<1x8x1xf32> to vector<8x1xf32>
      %110 = arith.mulf %104, %109 : vector<8x1xf32>
      %cst_55 = arith.constant dense<0.000000e+00> : vector<8xf32>
      %111 = vector.multi_reduction <add>, %107, %cst_55 [1] : vector<8x8xf32> to vector<8xf32>
      %112 = vector.shape_cast %111 : vector<8xf32> to vector<8x1xf32>
      %113 = arith.addf %110, %112 : vector<8x1xf32>
      %c1_56 = arith.constant 1 : index
      %c0_57 = arith.constant 0 : index
      %c0_58 = arith.constant 0 : index
      %114 = vector.load %arg21[%c1_56, %c0_57, %c0_58] : memref<4x8x1xf32, #tpu.memory_space<vmem>>, vector<1x8x1xf32>
      %115 = vector.shape_cast %114 : vector<1x8x1xf32> to vector<8x1xf32>
      %116 = vector.shape_cast %113 : vector<8x1xf32> to vector<1x8x1xf32>
      tpu.vector_store %arg21[%c1_56, %c0_57, %c0_58], %116 {strides = array<i32>} : memref<4x8x1xf32, #tpu.memory_space<vmem>>, vector<1x8x1xf32>,
      %c1_59 = arith.constant 1 : index
      %c0_60 = arith.constant 0 : index
      %c0_61 = arith.constant 0 : index
      %117 = vector.load %arg22[%c1_59, %c0_60, %c0_61] : memref<4x8x8xf32, #tpu.memory_space<vmem>>, vector<1x8x8xf32>
      %118 = vector.shape_cast %117 : vector<1x8x8xf32> to vector<8x8xf32>
      %119 = vector.broadcast %104 : vector<8x1xf32> to vector<8x8xf32>
      %120 = arith.mulf %119, %118 : vector<8x8xf32>
      %121 = arith.truncf %107 : vector<8x8xf32> to vector<8x8xbf16>
      %122 = vector.extract_strided_slice %44 {offsets = [0, 8], sizes = [8, 8], strides = [1, 1]} : vector<8x32xbf16> to vector<8x8xbf16>
      %cst_62 = arith.constant dense<0.000000e+00> : vector<8x8xf32>
      %123 = tpu.matmul %121, %122, %cst_62 {dimension_numbers = #tpu.dot_dimension_numbers<[1], [0], [0], [1], [0, 0, 1, 1], [], []>} : vector<8x8xbf16>, vector<8x8xbf16>, vector<8x8xf32> -> vector<8x8xf32>
      %124 = arith.addf %120, %123 : vector<8x8xf32>
      %c1_63 = arith.constant 1 : index
      %c0_64 = arith.constant 0 : index
      %c0_65 = arith.constant 0 : index
      %125 = vector.load %arg22[%c1_63, %c0_64, %c0_65] : memref<4x8x8xf32, #tpu.memory_space<vmem>>, vector<1x8x8xf32>
      %126 = vector.shape_cast %125 : vector<1x8x8xf32> to vector<8x8xf32>
      %127 = vector.shape_cast %124 : vector<8x8xf32> to vector<1x8x8xf32>
      tpu.vector_store %arg22[%c1_63, %c0_64, %c0_65], %127 {strides = array<i32>} : memref<4x8x8xf32, #tpu.memory_space<vmem>>, vector<1x8x8xf32>,
      %c1_66 = arith.constant 1 : index
      %c0_67 = arith.constant 0 : index
      %c0_68 = arith.constant 0 : index
      %128 = vector.load %arg20[%c1_66, %c0_67, %c0_68] : memref<4x8x1xf32, #tpu.memory_space<vmem>>, vector<1x8x1xf32>
      %129 = vector.shape_cast %128 : vector<1x8x1xf32> to vector<8x1xf32>
      %130 = vector.shape_cast %102 : vector<8x1xf32> to vector<1x8x1xf32>
      tpu.vector_store %arg20[%c1_66, %c0_67, %c0_68], %130 {strides = array<i32>} : memref<4x8x1xf32, #tpu.memory_space<vmem>>, vector<1x8x1xf32>,
      %131 = vector.extract_strided_slice %45 {offsets = [0, 16], sizes = [8, 8], strides = [1, 1]} : vector<8x32xbf16> to vector<8x8xbf16>
      %132 = vector.extract_strided_slice %41 {offsets = [0, 16], sizes = [8, 8], strides = [1, 1]} : vector<8x32xbf16> to vector<8x8xbf16>
      %cst_69 = arith.constant dense<0.000000e+00> : vector<8x8xf32>
      %133 = tpu.matmul %131, %132, %cst_69 {dimension_numbers = #tpu.dot_dimension_numbers<[1], [1], [0], [0], [0, 0, 1, 0], [], []>} : vector<8x8xbf16>, vector<8x8xbf16>, vector<8x8xf32> -> vector<8x8xf32>
      %cst_70 = arith.constant -1.000000e+30 : f32
      %134 = vector.broadcast %cst_70 : f32 to vector<8x8xf32>
      %135 = arith.select %54, %134, %133 : vector<8x8xi1>, vector<8x8xf32>
      %c2 = arith.constant 2 : index
      %c0_71 = arith.constant 0 : index
      %c0_72 = arith.constant 0 : index
      %136 = vector.load %arg20[%c2, %c0_71, %c0_72] : memref<4x8x1xf32, #tpu.memory_space<vmem>>, vector<1x8x1xf32>
      %137 = vector.shape_cast %136 : vector<1x8x1xf32> to vector<8x1xf32>
      %cst_73 = arith.constant dense<0xFF800000> : vector<8xf32>
      %138 = vector.multi_reduction <maximumf>, %135, %cst_73 [1] : vector<8x8xf32> to vector<8xf32>
      %139 = vector.shape_cast %138 : vector<8xf32> to vector<8x1xf32>
      %140 = arith.maximumf %137, %139 : vector<8x1xf32>
      %141 = arith.subf %137, %140 : vector<8x1xf32>
      %142 = math.exp %141 : vector<8x1xf32>
      %143 = vector.broadcast %140 : vector<8x1xf32> to vector<8x8xf32>
      %144 = arith.subf %135, %143 : vector<8x8xf32>
      %145 = math.exp %144 : vector<8x8xf32>
      %c2_74 = arith.constant 2 : index
      %c0_75 = arith.constant 0 : index
      %c0_76 = arith.constant 0 : index
      %146 = vector.load %arg21[%c2_74, %c0_75, %c0_76] : memref<4x8x1xf32, #tpu.memory_space<vmem>>, vector<1x8x1xf32>
      %147 = vector.shape_cast %146 : vector<1x8x1xf32> to vector<8x1xf32>
      %148 = arith.mulf %142, %147 : vector<8x1xf32>
      %cst_77 = arith.constant dense<0.000000e+00> : vector<8xf32>
      %149 = vector.multi_reduction <add>, %145, %cst_77 [1] : vector<8x8xf32> to vector<8xf32>
      %150 = vector.shape_cast %149 : vector<8xf32> to vector<8x1xf32>
      %151 = arith.addf %148, %150 : vector<8x1xf32>
      %c2_78 = arith.constant 2 : index
      %c0_79 = arith.constant 0 : index
      %c0_80 = arith.constant 0 : index
      %152 = vector.load %arg21[%c2_78, %c0_79, %c0_80] : memref<4x8x1xf32, #tpu.memory_space<vmem>>, vector<1x8x1xf32>
      %153 = vector.shape_cast %152 : vector<1x8x1xf32> to vector<8x1xf32>
      %154 = vector.shape_cast %151 : vector<8x1xf32> to vector<1x8x1xf32>
      tpu.vector_store %arg21[%c2_78, %c0_79, %c0_80], %154 {strides = array<i32>} : memref<4x8x1xf32, #tpu.memory_space<vmem>>, vector<1x8x1xf32>,
      %c2_81 = arith.constant 2 : index
      %c0_82 = arith.constant 0 : index
      %c0_83 = arith.constant 0 : index
      %155 = vector.load %arg22[%c2_81, %c0_82, %c0_83] : memref<4x8x8xf32, #tpu.memory_space<vmem>>, vector<1x8x8xf32>
      %156 = vector.shape_cast %155 : vector<1x8x8xf32> to vector<8x8xf32>
      %157 = vector.broadcast %142 : vector<8x1xf32> to vector<8x8xf32>
      %158 = arith.mulf %157, %156 : vector<8x8xf32>
      %159 = arith.truncf %145 : vector<8x8xf32> to vector<8x8xbf16>
      %160 = vector.extract_strided_slice %44 {offsets = [0, 16], sizes = [8, 8], strides = [1, 1]} : vector<8x32xbf16> to vector<8x8xbf16>
      %cst_84 = arith.constant dense<0.000000e+00> : vector<8x8xf32>
      %161 = tpu.matmul %159, %160, %cst_84 {dimension_numbers = #tpu.dot_dimension_numbers<[1], [0], [0], [1], [0, 0, 1, 1], [], []>} : vector<8x8xbf16>, vector<8x8xbf16>, vector<8x8xf32> -> vector<8x8xf32>
      %162 = arith.addf %158, %161 : vector<8x8xf32>
      %c2_85 = arith.constant 2 : index
      %c0_86 = arith.constant 0 : index
      %c0_87 = arith.constant 0 : index
      %163 = vector.load %arg22[%c2_85, %c0_86, %c0_87] : memref<4x8x8xf32, #tpu.memory_space<vmem>>, vector<1x8x8xf32>
      %164 = vector.shape_cast %163 : vector<1x8x8xf32> to vector<8x8xf32>
      %165 = vector.shape_cast %162 : vector<8x8xf32> to vector<1x8x8xf32>
      tpu.vector_store %arg22[%c2_85, %c0_86, %c0_87], %165 {strides = array<i32>} : memref<4x8x8xf32, #tpu.memory_space<vmem>>, vector<1x8x8xf32>,
      %c2_88 = arith.constant 2 : index
      %c0_89 = arith.constant 0 : index
      %c0_90 = arith.constant 0 : index
      %166 = vector.load %arg20[%c2_88, %c0_89, %c0_90] : memref<4x8x1xf32, #tpu.memory_space<vmem>>, vector<1x8x1xf32>
      %167 = vector.shape_cast %166 : vector<1x8x1xf32> to vector<8x1xf32>
      %168 = vector.shape_cast %140 : vector<8x1xf32> to vector<1x8x1xf32>
      tpu.vector_store %arg20[%c2_88, %c0_89, %c0_90], %168 {strides = array<i32>} : memref<4x8x1xf32, #tpu.memory_space<vmem>>, vector<1x8x1xf32>,
      %169 = vector.extract_strided_slice %45 {offsets = [0, 24], sizes = [8, 8], strides = [1, 1]} : vector<8x32xbf16> to vector<8x8xbf16>
      %170 = vector.extract_strided_slice %41 {offsets = [0, 24], sizes = [8, 8], strides = [1, 1]} : vector<8x32xbf16> to vector<8x8xbf16>
      %cst_91 = arith.constant dense<0.000000e+00> : vector<8x8xf32>
      %171 = tpu.matmul %169, %170, %cst_91 {dimension_numbers = #tpu.dot_dimension_numbers<[1], [1], [0], [0], [0, 0, 1, 0], [], []>} : vector<8x8xbf16>, vector<8x8xbf16>, vector<8x8xf32> -> vector<8x8xf32>
      %cst_92 = arith.constant -1.000000e+30 : f32
      %172 = vector.broadcast %cst_92 : f32 to vector<8x8xf32>
      %173 = arith.select %54, %172, %171 : vector<8x8xi1>, vector<8x8xf32>
      %c3 = arith.constant 3 : index
      %c0_93 = arith.constant 0 : index
      %c0_94 = arith.constant 0 : index
      %174 = vector.load %arg20[%c3, %c0_93, %c0_94] : memref<4x8x1xf32, #tpu.memory_space<vmem>>, vector<1x8x1xf32>
      %175 = vector.shape_cast %174 : vector<1x8x1xf32> to vector<8x1xf32>
      %cst_95 = arith.constant dense<0xFF800000> : vector<8xf32>
      %176 = vector.multi_reduction <maximumf>, %173, %cst_95 [1] : vector<8x8xf32> to vector<8xf32>
      %177 = vector.shape_cast %176 : vector<8xf32> to vector<8x1xf32>
      %178 = arith.maximumf %175, %177 : vector<8x1xf32>
      %179 = arith.subf %175, %178 : vector<8x1xf32>
      %180 = math.exp %179 : vector<8x1xf32>
      %181 = vector.broadcast %178 : vector<8x1xf32> to vector<8x8xf32>
      %182 = arith.subf %173, %181 : vector<8x8xf32>
      %183 = math.exp %182 : vector<8x8xf32>
      %c3_96 = arith.constant 3 : index
      %c0_97 = arith.constant 0 : index
      %c0_98 = arith.constant 0 : index
      %184 = vector.load %arg21[%c3_96, %c0_97, %c0_98] : memref<4x8x1xf32, #tpu.memory_space<vmem>>, vector<1x8x1xf32>
      %185 = vector.shape_cast %184 : vector<1x8x1xf32> to vector<8x1xf32>
      %186 = arith.mulf %180, %185 : vector<8x1xf32>
      %cst_99 = arith.constant dense<0.000000e+00> : vector<8xf32>
      %187 = vector.multi_reduction <add>, %183, %cst_99 [1] : vector<8x8xf32> to vector<8xf32>
      %188 = vector.shape_cast %187 : vector<8xf32> to vector<8x1xf32>
      %189 = arith.addf %186, %188 : vector<8x1xf32>
      %c3_100 = arith.constant 3 : index
      %c0_101 = arith.constant 0 : index
      %c0_102 = arith.constant 0 : index
      %190 = vector.load %arg21[%c3_100, %c0_101, %c0_102] : memref<4x8x1xf32, #tpu.memory_space<vmem>>, vector<1x8x1xf32>
      %191 = vector.shape_cast %190 : vector<1x8x1xf32> to vector<8x1xf32>
      %192 = vector.shape_cast %189 : vector<8x1xf32> to vector<1x8x1xf32>
      tpu.vector_store %arg21[%c3_100, %c0_101, %c0_102], %192 {strides = array<i32>} : memref<4x8x1xf32, #tpu.memory_space<vmem>>, vector<1x8x1xf32>,
      %c3_103 = arith.constant 3 : index
      %c0_104 = arith.constant 0 : index
      %c0_105 = arith.constant 0 : index
      %193 = vector.load %arg22[%c3_103, %c0_104, %c0_105] : memref<4x8x8xf32, #tpu.memory_space<vmem>>, vector<1x8x8xf32>
      %194 = vector.shape_cast %193 : vector<1x8x8xf32> to vector<8x8xf32>
      %195 = vector.broadcast %180 : vector<8x1xf32> to vector<8x8xf32>
      %196 = arith.mulf %195, %194 : vector<8x8xf32>
      %197 = arith.truncf %183 : vector<8x8xf32> to vector<8x8xbf16>
      %198 = vector.extract_strided_slice %44 {offsets = [0, 24], sizes = [8, 8], strides = [1, 1]} : vector<8x32xbf16> to vector<8x8xbf16>
      %cst_106 = arith.constant dense<0.000000e+00> : vector<8x8xf32>
      %199 = tpu.matmul %197, %198, %cst_106 {dimension_numbers = #tpu.dot_dimension_numbers<[1], [0], [0], [1], [0, 0, 1, 1], [], []>} : vector<8x8xbf16>, vector<8x8xbf16>, vector<8x8xf32> -> vector<8x8xf32>
      %200 = arith.addf %196, %199 : vector<8x8xf32>
      %c3_107 = arith.constant 3 : index
      %c0_108 = arith.constant 0 : index
      %c0_109 = arith.constant 0 : index
      %201 = vector.load %arg22[%c3_107, %c0_108, %c0_109] : memref<4x8x8xf32, #tpu.memory_space<vmem>>, vector<1x8x8xf32>
      %202 = vector.shape_cast %201 : vector<1x8x8xf32> to vector<8x8xf32>
      %203 = vector.shape_cast %200 : vector<8x8xf32> to vector<1x8x8xf32>
      tpu.vector_store %arg22[%c3_107, %c0_108, %c0_109], %203 {strides = array<i32>} : memref<4x8x8xf32, #tpu.memory_space<vmem>>, vector<1x8x8xf32>,
      %c3_110 = arith.constant 3 : index
      %c0_111 = arith.constant 0 : index
      %c0_112 = arith.constant 0 : index
      %204 = vector.load %arg20[%c3_110, %c0_111, %c0_112] : memref<4x8x1xf32, #tpu.memory_space<vmem>>, vector<1x8x1xf32>
      %205 = vector.shape_cast %204 : vector<1x8x1xf32> to vector<8x1xf32>
      %206 = vector.shape_cast %178 : vector<8x1xf32> to vector<1x8x1xf32>
      tpu.vector_store %arg20[%c3_110, %c0_111, %c0_112], %206 {strides = array<i32>} : memref<4x8x1xf32, #tpu.memory_space<vmem>>, vector<1x8x1xf32>,
    } else {
    }
    %c1_i32 = arith.constant 1 : i32
    %9 = arith.cmpi eq, %arg2, %c1_i32 : i32
    %10 = arith.extui %9 : i1 to i32
    %c0_i32_3 = arith.constant 0 : i32
    %11 = arith.cmpi ne, %10, %c0_i32_3 : i32
    scf.if %11 {
      %c0 = arith.constant 0 : index
      %c0_4 = arith.constant 0 : index
      %12 = vector.load %arg8[%c0, %c0_4] : memref<32x32xbf16, #tpu.memory_space<vmem>>, vector<32x32xbf16>
      %cst = arith.constant 0.000000e+00 : f32
      %13 = vector.broadcast %cst : f32 to vector<8x32xf32>
      %c0_5 = arith.constant 0 : index
      %c0_6 = arith.constant 0 : index
      %c0_7 = arith.constant 0 : index
      %14 = vector.load %arg21[%c0_5, %c0_6, %c0_7] : memref<4x8x1xf32, #tpu.memory_space<vmem>>, vector<1x8x1xf32>
      %15 = vector.shape_cast %14 : vector<1x8x1xf32> to vector<8x1xf32>
      %16 = tpu.reciprocal %15 {approx = true} : vector<8x1xf32> -> vector<8x1xf32>
      %c0_8 = arith.constant 0 : index
      %c0_9 = arith.constant 0 : index
      %c0_10 = arith.constant 0 : index
      %17 = vector.load %arg22[%c0_8, %c0_9, %c0_10] : memref<4x8x8xf32, #tpu.memory_space<vmem>>, vector<1x8x8xf32>
      %18 = vector.shape_cast %17 : vector<1x8x8xf32> to vector<8x8xf32>
      %19 = vector.broadcast %16 : vector<8x1xf32> to vector<8x8xf32>
      %20 = arith.mulf %18, %19 : vector<8x8xf32>
      %21 = arith.truncf %20 : vector<8x8xf32> to vector<8x8xbf16>
      %22 = vector.extract_strided_slice %12 {offsets = [0, 0], sizes = [8, 32], strides = [1, 1]} : vector<32x32xbf16> to vector<8x32xbf16>
      %cst_11 = arith.constant dense<0.000000e+00> : vector<8x32xf32>
      %23 = tpu.matmul %21, %22, %cst_11 {dimension_numbers = #tpu.dot_dimension_numbers<[1], [0], [0], [1], [0, 0, 1, 1], [], []>} : vector<8x8xbf16>, vector<8x32xbf16>, vector<8x32xf32> -> vector<8x32xf32>
      %24 = arith.addf %13, %23 : vector<8x32xf32>
      %c1 = arith.constant 1 : index
      %c0_12 = arith.constant 0 : index
      %c0_13 = arith.constant 0 : index
      %25 = vector.load %arg21[%c1, %c0_12, %c0_13] : memref<4x8x1xf32, #tpu.memory_space<vmem>>, vector<1x8x1xf32>
      %26 = vector.shape_cast %25 : vector<1x8x1xf32> to vector<8x1xf32>
      %27 = tpu.reciprocal %26 {approx = true} : vector<8x1xf32> -> vector<8x1xf32>
      %c1_14 = arith.constant 1 : index
      %c0_15 = arith.constant 0 : index
      %c0_16 = arith.constant 0 : index
      %28 = vector.load %arg22[%c1_14, %c0_15, %c0_16] : memref<4x8x8xf32, #tpu.memory_space<vmem>>, vector<1x8x8xf32>
      %29 = vector.shape_cast %28 : vector<1x8x8xf32> to vector<8x8xf32>
      %30 = vector.broadcast %27 : vector<8x1xf32> to vector<8x8xf32>
      %31 = arith.mulf %29, %30 : vector<8x8xf32>
      %32 = arith.truncf %31 : vector<8x8xf32> to vector<8x8xbf16>
      %33 = vector.extract_strided_slice %12 {offsets = [8, 0], sizes = [8, 32], strides = [1, 1]} : vector<32x32xbf16> to vector<8x32xbf16>
      %cst_17 = arith.constant dense<0.000000e+00> : vector<8x32xf32>
      %34 = tpu.matmul %32, %33, %cst_17 {dimension_numbers = #tpu.dot_dimension_numbers<[1], [0], [0], [1], [0, 0, 1, 1], [], []>} : vector<8x8xbf16>, vector<8x32xbf16>, vector<8x32xf32> -> vector<8x32xf32>
      %35 = arith.addf %24, %34 : vector<8x32xf32>
      %c2 = arith.constant 2 : index
      %c0_18 = arith.constant 0 : index
      %c0_19 = arith.constant 0 : index
      %36 = vector.load %arg21[%c2, %c0_18, %c0_19] : memref<4x8x1xf32, #tpu.memory_space<vmem>>, vector<1x8x1xf32>
      %37 = vector.shape_cast %36 : vector<1x8x1xf32> to vector<8x1xf32>
      %38 = tpu.reciprocal %37 {approx = true} : vector<8x1xf32> -> vector<8x1xf32>
      %c2_20 = arith.constant 2 : index
      %c0_21 = arith.constant 0 : index
      %c0_22 = arith.constant 0 : index
      %39 = vector.load %arg22[%c2_20, %c0_21, %c0_22] : memref<4x8x8xf32, #tpu.memory_space<vmem>>, vector<1x8x8xf32>
      %40 = vector.shape_cast %39 : vector<1x8x8xf32> to vector<8x8xf32>
      %41 = vector.broadcast %38 : vector<8x1xf32> to vector<8x8xf32>
      %42 = arith.mulf %40, %41 : vector<8x8xf32>
      %43 = arith.truncf %42 : vector<8x8xf32> to vector<8x8xbf16>
      %44 = vector.extract_strided_slice %12 {offsets = [16, 0], sizes = [8, 32], strides = [1, 1]} : vector<32x32xbf16> to vector<8x32xbf16>
      %cst_23 = arith.constant dense<0.000000e+00> : vector<8x32xf32>
      %45 = tpu.matmul %43, %44, %cst_23 {dimension_numbers = #tpu.dot_dimension_numbers<[1], [0], [0], [1], [0, 0, 1, 1], [], []>} : vector<8x8xbf16>, vector<8x32xbf16>, vector<8x32xf32> -> vector<8x32xf32>
      %46 = arith.addf %35, %45 : vector<8x32xf32>
      %c3 = arith.constant 3 : index
      %c0_24 = arith.constant 0 : index
      %c0_25 = arith.constant 0 : index
      %47 = vector.load %arg21[%c3, %c0_24, %c0_25] : memref<4x8x1xf32, #tpu.memory_space<vmem>>, vector<1x8x1xf32>
      %48 = vector.shape_cast %47 : vector<1x8x1xf32> to vector<8x1xf32>
      %49 = tpu.reciprocal %48 {approx = true} : vector<8x1xf32> -> vector<8x1xf32>
      %c3_26 = arith.constant 3 : index
      %c0_27 = arith.constant 0 : index
      %c0_28 = arith.constant 0 : index
      %50 = vector.load %arg22[%c3_26, %c0_27, %c0_28] : memref<4x8x8xf32, #tpu.memory_space<vmem>>, vector<1x8x8xf32>
      %51 = vector.shape_cast %50 : vector<1x8x8xf32> to vector<8x8xf32>
      %52 = vector.broadcast %49 : vector<8x1xf32> to vector<8x8xf32>
      %53 = arith.mulf %51, %52 : vector<8x8xf32>
      %54 = arith.truncf %53 : vector<8x8xf32> to vector<8x8xbf16>
      %55 = vector.extract_strided_slice %12 {offsets = [24, 0], sizes = [8, 32], strides = [1, 1]} : vector<32x32xbf16> to vector<8x32xbf16>
      %cst_29 = arith.constant dense<0.000000e+00> : vector<8x32xf32>
      %56 = tpu.matmul %54, %55, %cst_29 {dimension_numbers = #tpu.dot_dimension_numbers<[1], [0], [0], [1], [0, 0, 1, 1], [], []>} : vector<8x8xbf16>, vector<8x32xbf16>, vector<8x32xf32> -> vector<8x32xf32>
      %57 = arith.addf %46, %56 : vector<8x32xf32>
      %c0_30 = arith.constant 0 : index
      %c0_31 = arith.constant 0 : index
      %58 = vector.load %arg9[%c0_30, %c0_31] : memref<1x32xf32, #tpu.memory_space<vmem>>, vector<1x32xf32>
      %59 = vector.broadcast %58 : vector<1x32xf32> to vector<8x32xf32>
      %60 = arith.addf %57, %59 : vector<8x32xf32>
      %c0_32 = arith.constant 0 : index
      %c0_33 = arith.constant 0 : index
      %c0_34 = arith.constant 0 : index
      %61 = vector.load %arg3[%c0_32, %c0_33, %c0_34] : memref<1x8x32xf32, #tpu.memory_space<vmem>>, vector<1x8x32xf32>
      %62 = vector.shape_cast %61 : vector<1x8x32xf32> to vector<8x32xf32>
      %63 = arith.addf %62, %60 : vector<8x32xf32>
      %c0_35 = arith.constant 0 : index
      %c0_36 = arith.constant 0 : index
      %64 = vector.load %arg16[%c0_35, %c0_36] : memref<1x32xf32, #tpu.memory_space<vmem>>, vector<1x32xf32>
      %c0_37 = arith.constant 0 : index
      %c0_38 = arith.constant 0 : index
      %65 = vector.load %arg17[%c0_37, %c0_38] : memref<1x32xf32, #tpu.memory_space<vmem>>, vector<1x32xf32>
      %cst_39 = arith.constant dense<0.000000e+00> : vector<8xf32>
      %66 = vector.multi_reduction <add>, %63, %cst_39 [1] : vector<8x32xf32> to vector<8xf32>
      %67 = vector.shape_cast %66 : vector<8xf32> to vector<8x1xf32>
      %68 = arith.mulf %63, %63 : vector<8x32xf32>
      %cst_40 = arith.constant dense<0.000000e+00> : vector<8xf32>
      %69 = vector.multi_reduction <add>, %68, %cst_40 [1] : vector<8x32xf32> to vector<8xf32>
      %70 = vector.shape_cast %69 : vector<8xf32> to vector<8x1xf32>
      %cst_41 = arith.constant 3.200000e+01 : f32
      %71 = vector.broadcast %cst_41 : f32 to vector<8x1xf32>
      %72 = arith.divf %67, %71 : vector<8x1xf32>
      %cst_42 = arith.constant 3.200000e+01 : f32
      %73 = vector.broadcast %cst_42 : f32 to vector<8x1xf32>
      %74 = arith.divf %70, %73 : vector<8x1xf32>
      %75 = arith.mulf %72, %72 : vector<8x1xf32>
      %76 = arith.subf %74, %75 : vector<8x1xf32>
      %cst_43 = arith.constant 9.99999974E-6 : f32
      %77 = vector.broadcast %cst_43 : f32 to vector<8x1xf32>
      %78 = arith.addf %76, %77 : vector<8x1xf32>
      %79 = math.rsqrt %78 : vector<8x1xf32>
      %80 = vector.broadcast %72 : vector<8x1xf32> to vector<8x32xf32>
      %81 = arith.subf %63, %80 : vector<8x32xf32>
      %82 = vector.broadcast %79 : vector<8x1xf32> to vector<8x32xf32>
      %83 = arith.mulf %81, %82 : vector<8x32xf32>
      %84 = vector.broadcast %64 : vector<1x32xf32> to vector<8x32xf32>
      %85 = arith.mulf %83, %84 : vector<8x32xf32>
      %86 = vector.broadcast %65 : vector<1x32xf32> to vector<8x32xf32>
      %87 = arith.addf %85, %86 : vector<8x32xf32>
      %88 = arith.truncf %87 : vector<8x32xf32> to vector<8x32xbf16>
      %c0_44 = arith.constant 0 : index
      %c0_45 = arith.constant 0 : index
      %89 = vector.load %arg10[%c0_44, %c0_45] : memref<32x128xbf16, #tpu.memory_space<vmem>>, vector<32x128xbf16>
      %cst_46 = arith.constant dense<0.000000e+00> : vector<8x128xf32>
      %90 = tpu.matmul %88, %89, %cst_46 {dimension_numbers = #tpu.dot_dimension_numbers<[1], [0], [0], [1], [0, 0, 1, 1], [], []>} : vector<8x32xbf16>, vector<32x128xbf16>, vector<8x128xf32> -> vector<8x128xf32>
      %c0_47 = arith.constant 0 : index
      %c0_48 = arith.constant 0 : index
      %91 = vector.load %arg11[%c0_47, %c0_48] : memref<1x128xf32, #tpu.memory_space<vmem>>, vector<1x128xf32>
      %92 = vector.broadcast %91 : vector<1x128xf32> to vector<8x128xf32>
      %93 = arith.addf %90, %92 : vector<8x128xf32>
      %cst_49 = arith.constant 5.000000e-01 : f32
      %94 = vector.broadcast %cst_49 : f32 to vector<8x128xf32>
      %95 = arith.mulf %94, %93 : vector<8x128xf32>
      %cst_50 = arith.constant 4.471500e-02 : f32
      %96 = vector.broadcast %cst_50 : f32 to vector<8x128xf32>
      %97 = arith.mulf %96, %93 : vector<8x128xf32>
      %98 = arith.mulf %97, %93 : vector<8x128xf32>
      %99 = arith.mulf %98, %93 : vector<8x128xf32>
      %100 = arith.addf %93, %99 : vector<8x128xf32>
      %cst_51 = arith.constant 0.797884583 : f32
      %101 = vector.broadcast %cst_51 : f32 to vector<8x128xf32>
      %102 = arith.mulf %101, %100 : vector<8x128xf32>
      %103 = math.tanh %102 : vector<8x128xf32>
      %cst_52 = arith.constant 1.000000e+00 : f32
      %104 = vector.broadcast %cst_52 : f32 to vector<8x128xf32>
      %105 = arith.addf %104, %103 : vector<8x128xf32>
      %106 = arith.mulf %95, %105 : vector<8x128xf32>
      %107 = arith.truncf %106 : vector<8x128xf32> to vector<8x128xbf16>
      %c0_53 = arith.constant 0 : index
      %c0_54 = arith.constant 0 : index
      %108 = vector.load %arg12[%c0_53, %c0_54] : memref<128x32xbf16, #tpu.memory_space<vmem>>, vector<128x32xbf16>
      %cst_55 = arith.constant dense<0.000000e+00> : vector<8x32xf32>
      %109 = tpu.matmul %107, %108, %cst_55 {dimension_numbers = #tpu.dot_dimension_numbers<[1], [0], [0], [1], [0, 0, 1, 1], [], []>} : vector<8x128xbf16>, vector<128x32xbf16>, vector<8x32xf32> -> vector<8x32xf32>
      %c0_56 = arith.constant 0 : index
      %c0_57 = arith.constant 0 : index
      %110 = vector.load %arg13[%c0_56, %c0_57] : memref<1x32xf32, #tpu.memory_space<vmem>>, vector<1x32xf32>
      %111 = vector.broadcast %110 : vector<1x32xf32> to vector<8x32xf32>
      %112 = arith.addf %109, %111 : vector<8x32xf32>
      %113 = arith.addf %63, %112 : vector<8x32xf32>
      %c0_58 = arith.constant 0 : index
      %c0_59 = arith.constant 0 : index
      %c0_60 = arith.constant 0 : index
      %114 = vector.load %arg18[%c0_58, %c0_59, %c0_60] : memref<1x8x32xf32, #tpu.memory_space<vmem>>, vector<1x8x32xf32>
      %115 = vector.shape_cast %114 : vector<1x8x32xf32> to vector<8x32xf32>
      %116 = vector.shape_cast %113 : vector<8x32xf32> to vector<1x8x32xf32>
      tpu.vector_store %arg18[%c0_58, %c0_59, %c0_60], %116 {strides = array<i32>} : memref<1x8x32xf32, #tpu.memory_space<vmem>>, vector<1x8x32xf32>,
    } else {
    }
    return
  }
  func.func @transform_0(%arg0: i32, %arg1: i32, %arg2: i32) -> (i32, i32, i32) {
    %c0_i32 = arith.constant 0 : i32
    %c0_i32_0 = arith.constant 0 : i32
    return %arg0, %arg1, %c0_i32 : i32, i32, i32
  }
  func.func @transform_1(%arg0: i32, %arg1: i32, %arg2: i32) -> (i32, i32, i32) {
    %c0_i32 = arith.constant 0 : i32
    %c0_i32_0 = arith.constant 0 : i32
    return %arg0, %arg2, %c0_i32 : i32, i32, i32
  }
  func.func @transform_2(%arg0: i32, %arg1: i32, %arg2: i32) -> (i32, i32) {
    %c0_i32 = arith.constant 0 : i32
    %c0_i32_0 = arith.constant 0 : i32
    %c0_i32_1 = arith.constant 0 : i32
    return %c0_i32, %c0_i32_0 : i32, i32
  }
  func.func @transform_3(%arg0: i32, %arg1: i32, %arg2: i32) -> (i32, i32) {
    %c0_i32 = arith.constant 0 : i32
    %c0_i32_0 = arith.constant 0 : i32
    %c0_i32_1 = arith.constant 0 : i32
    return %c0_i32, %c0_i32_0 : i32, i32
  }
  func.func @transform_4(%arg0: i32, %arg1: i32, %arg2: i32) -> (i32, i32) {
    %c0_i32 = arith.constant 0 : i32
    %c0_i32_0 = arith.constant 0 : i32
    %c0_i32_1 = arith.constant 0 : i32
    return %c0_i32, %c0_i32_0 : i32, i32
  }
  func.func @transform_5(%arg0: i32, %arg1: i32, %arg2: i32) -> (i32, i32) {
    %c0_i32 = arith.constant 0 : i32
    %c0_i32_0 = arith.constant 0 : i32
    %c0_i32_1 = arith.constant 0 : i32
    return %c0_i32, %c0_i32_0 : i32, i32
  }
  func.func @transform_6(%arg0: i32, %arg1: i32, %arg2: i32) -> (i32, i32) {
    %c0_i32 = arith.constant 0 : i32
    %c0_i32_0 = arith.constant 0 : i32
    %c0_i32_1 = arith.constant 0 : i32
    return %c0_i32, %c0_i32_0 : i32, i32
  }
  func.func @transform_7(%arg0: i32, %arg1: i32, %arg2: i32) -> (i32, i32) {
    %c0_i32 = arith.constant 0 : i32
    %c0_i32_0 = arith.constant 0 : i32
    %c0_i32_1 = arith.constant 0 : i32
    return %c0_i32, %c0_i32_0 : i32, i32
  }
  func.func @transform_8(%arg0: i32, %arg1: i32, %arg2: i32) -> (i32, i32) {
    %c0_i32 = arith.constant 0 : i32
    %c0_i32_0 = arith.constant 0 : i32
    %c0_i32_1 = arith.constant 0 : i32
    return %c0_i32, %c0_i32_0 : i32, i32
  }
  func.func @transform_9(%arg0: i32, %arg1: i32, %arg2: i32) -> (i32, i32) {
    %c0_i32 = arith.constant 0 : i32
    %c0_i32_0 = arith.constant 0 : i32
    %c0_i32_1 = arith.constant 0 : i32
    return %c0_i32, %c0_i32_0 : i32, i32
  }
  func.func @transform_10(%arg0: i32, %arg1: i32, %arg2: i32) -> (i32, i32) {
    %c0_i32 = arith.constant 0 : i32
    %c0_i32_0 = arith.constant 0 : i32
    %c0_i32_1 = arith.constant 0 : i32
    return %c0_i32, %c0_i32_0 : i32, i32
  }
  func.func @transform_11(%arg0: i32, %arg1: i32, %arg2: i32) -> (i32, i32) {
    %c0_i32 = arith.constant 0 : i32
    %c0_i32_0 = arith.constant 0 : i32
    %c0_i32_1 = arith.constant 0 : i32
    return %c0_i32, %c0_i32_0 : i32, i32
  }
  func.func @transform_12(%arg0: i32, %arg1: i32, %arg2: i32) -> (i32, i32) {
    %c0_i32 = arith.constant 0 : i32
    %c0_i32_0 = arith.constant 0 : i32
    %c0_i32_1 = arith.constant 0 : i32
    return %c0_i32, %c0_i32_0 : i32, i32
  }
  func.func @transform_13(%arg0: i32, %arg1: i32, %arg2: i32) -> (i32, i32) {
    %c0_i32 = arith.constant 0 : i32
    %c0_i32_0 = arith.constant 0 : i32
    %c0_i32_1 = arith.constant 0 : i32
    return %c0_i32, %c0_i32_0 : i32, i32
  }
  func.func @transform_14(%arg0: i32, %arg1: i32, %arg2: i32) -> (i32, i32) {
    %c0_i32 = arith.constant 0 : i32
    %c0_i32_0 = arith.constant 0 : i32
    %c0_i32_1 = arith.constant 0 : i32
    return %c0_i32, %c0_i32_0 : i32, i32
  }
  func.func @transform_15(%arg0: i32, %arg1: i32, %arg2: i32) -> (i32, i32, i32) {
    %c0_i32 = arith.constant 0 : i32
    %c0_i32_0 = arith.constant 0 : i32
    return %arg0, %arg1, %c0_i32 : i32, i32, i32
  }
}

</mosaic_0001>

<llo_original>
// kernel: tpu_custom_call.1
$region0: #{tpu_custom_call.1}
  #allocation0 [shape = 'u32[]', space=smem, size = 0x4, offset = 0x4, fixed_abs, tag = 'smem constant byte address 0x4 - core index']
  #allocation1 [shape = 'u32[144,128]{1,0:T(1,128)}', space=vmem, size = 0x12000, scoped, tag = 'internal scratch']
  #allocation2 [shape = 'bf16[8,32]{1,0:T(8,128)(2,1)}', space=vmem, size = 0x800, scoped, tag = 'scratch operand']
  #allocation3 [shape = 'f32[4,8,1]{2,1,0:T(8,128)}', space=vmem, size = 0x4000, scoped, tag = 'scratch operand']
  #allocation4 [shape = 'f32[4,8,1]{2,1,0:T(8,128)}', space=vmem, size = 0x4000, scoped, tag = 'scratch operand']
  #allocation5 [shape = 'f32[4,8,8]{2,1,0:T(8,128)}', space=vmem, size = 0x4000, scoped, tag = 'scratch operand']
  %s0 = inlined_call_operand.vmem [shape: f32[2,16,32], index: 0, kind: input, shape index: {}]
  %s1 = inlined_call_operand.vmem [shape: f32[2,16,32], index: 1, kind: input, shape index: {}]
  %s2 = inlined_call_operand.vmem [shape: bf16[32,32], index: 2, kind: input, shape index: {}]
  %s3 = inlined_call_operand.hbm [shape: bf16[32,32], index: 3, kind: input, shape index: {}]
  %s4 = inlined_call_operand.hbm [shape: bf16[32,32], index: 4, kind: input, shape index: {}]
  %s5 = inlined_call_operand.hbm [shape: bf16[32,32], index: 5, kind: input, shape index: {}]
  %s6 = inlined_call_operand.vmem [shape: f32[1,32], index: 6, kind: input, shape index: {}]
  %s7 = inlined_call_operand.hbm [shape: bf16[32,128], index: 7, kind: input, shape index: {}]
  %s8 = inlined_call_operand.vmem [shape: f32[1,128], index: 8, kind: input, shape index: {}]
  %s9 = inlined_call_operand.vmem [shape: bf16[128,32], index: 9, kind: input, shape index: {}]
  %s10 = inlined_call_operand.vmem [shape: f32[1,32], index: 10, kind: input, shape index: {}]
  %s11 = inlined_call_operand.vmem [shape: f32[1,32], index: 11, kind: input, shape index: {}]
  %s12 = inlined_call_operand.vmem [shape: f32[1,32], index: 12, kind: input, shape index: {}]
  %s13 = inlined_call_operand.vmem [shape: f32[1,32], index: 13, kind: input, shape index: {}]
  %s14 = inlined_call_operand.vmem [shape: f32[1,32], index: 14, kind: input, shape index: {}]
  %s15 = inlined_call_operand.hbm [shape: f32[2,16,32], index: 15, kind: output, shape index: {}]
  %s16 = sld [smem:[#allocation0]]
  $region121: #{tpu_custom_call.1} parent=0
    _
  %s18 = ssub.s32 1, %s16
  %s19 = scalar_select 0, %s18, %s16
  $region1: #{tpu_custom_call.1} parent=0
    #allocation6 [shape = 'u8[8192]{0}', space=vmem, size = 0x2000, scoped, tag = 'input window, operand 3, single buffered']
    #allocation7 [shape = 's32[2]{0}', space=sflag, size = 0x8, scoped, tag = 'scoped memory for tpu_custom_call.1']
    #allocation8 [shape = 's32[2]{0}', space=sflag, size = 0x8, scoped, tag = 'scoped memory for tpu_custom_call.1']
    #allocation9 [shape = 'u8[8192]{0}', space=vmem, size = 0x2000, scoped, tag = 'input window, operand 4, single buffered']
    #allocation10 [shape = 's32[1]{0}', space=sflag, size = 0x4, scoped, tag = 'scoped memory for tpu_custom_call.1']
    #allocation11 [shape = 'u8[8192]{0}', space=vmem, size = 0x2000, scoped, tag = 'input window, operand 5, single buffered']
    #allocation12 [shape = 'u8[8192]{0}', space=vmem, size = 0x2000, scoped, tag = 'input window, operand 7, single buffered']
    #allocation13 [shape = 's32[1]{0}', space=sflag, size = 0x4, scoped, tag = 'scoped memory for tpu_custom_call.1']
    #allocation14 [shape = 'u8[8192]{0}', space=vmem, size = 0x2000, scoped, tag = 'output window, operand 0']
    %20 = vsyncpa [#allocation7], 0
    %21 = vsyncpa [#allocation10], 0
    %22 = vsyncpa [#allocation13], 0
    %23 = vsyncpa [#allocation8], 0
    %s24 = scalar_lea.sflag [#allocation8], 1
    %25 = vsyncpa %s24, 0
    loop: start=0, step=1, limit=10
    $region2: #{tpu_custom_call.1} parent=1 // loop_pre_header
      _
    $region3: #{tpu_custom_call.1} parent=1 // loop_header
      %s27 = sphi 0, %s31
      %p28 = scmp.ge.s32.totalorder %s27, 10
      %s34 = sphi 0, %s53
      %s35 = sphi 0, %s49
      %s36 = sphi 0, %s45
      %s37 = sphi 0, %s34
      %s38 = sphi 0, %s35
      %s39 = sphi 0, %s36
      %s40 = sphi 0, %s37
      %s41 = sphi 0, %s38
      %s42 = sphi 0, %s39
      %s58 = sphi 0, %s60
      %s61 = sphi 0, %s58
      %s62 = sphi 0, %s61
      %s78 = sphi 0, %s62
      %s86 = sphi 0, %s88
      %s89 = sphi 0, %s86
      %s90 = sphi 0, %s89
      %s106 = sphi 0, %s90
      %s110 = sphi 0, %s110
      %s112 = sphi 0, %s110
      %s113 = sphi 0, %s112
      %s127 = sphi 0, %s113
      %s131 = sphi 0, %s131
      %s133 = sphi 0, %s131
      %s134 = sphi 0, %s133
      %s148 = sphi 0, %s134
      %s152 = sphi 0, %s152
      %s154 = sphi 0, %s152
      %s155 = sphi 0, %s154
      %s169 = sphi 0, %s155
      %s173 = sphi 0, %s173
      %s175 = sphi 0, %s173
      %s176 = sphi 0, %s175
      %s190 = sphi 0, %s176
      %s194 = sphi 0, %s194
      %s196 = sphi 0, %s194
      %s197 = sphi 0, %s196
      %s211 = sphi 0, %s197
      %s215 = sphi 0, %s215
      %s217 = sphi 0, %s215
      %s218 = sphi 0, %s217
      %s232 = sphi 0, %s218
      %s236 = sphi 0, %s236
      %s238 = sphi 0, %s236
      %s239 = sphi 0, %s238
      %s253 = sphi 0, %s239
      %s257 = sphi 0, %s257
      %s259 = sphi 0, %s257
      %s260 = sphi 0, %s259
      %s274 = sphi 0, %s260
      %s278 = sphi 0, %s278
      %s280 = sphi 0, %s278
      %s281 = sphi 0, %s280
      %s295 = sphi 0, %s281
      %s299 = sphi 0, %s299
      %s301 = sphi 0, %s299
      %s302 = sphi 0, %s301
      %s316 = sphi 0, %s302
      %s320 = sphi 0, %s320
      %s322 = sphi 0, %s320
      %s323 = sphi 0, %s322
      %s337 = sphi 0, %s323
      %s341 = sphi 0, %s341
      %s343 = sphi 0, %s341
      %s344 = sphi 0, %s343
      %s358 = sphi 0, %s344
      %s362 = sphi 0, %s362
      %s364 = sphi 0, %s362
      %s365 = sphi 0, %s364
      %s379 = sphi 0, %s365
      %s387 = sphi 0, %s389
      %s390 = sphi 0, %s387
      %s391 = sphi 0, %s390
      %s407 = sphi 0, %s391
    $region4: #{tpu_custom_call.1} parent=1 // loop_header_branch
      %30 = sbr.rel (%p28) target = $region8
    $region5: #{tpu_custom_call.1} parent=1 // loop_body
      %s32 = ssub.s32 %s27, 1
      %s33 = ssub.s32 %s27, 2
      %s43 = sadd.s32 1, %s36
      %p44 = scmp.ge.s32.totalorder %s43, 2
      %s45 = scalar_select %p44, 0, %s43
      %s46 = sadd.s32 1, %s35
      %s47 = scalar_select %p44, %s46, %s35
      %p48 = scmp.ge.s32.totalorder %s47, 2
      %s49 = scalar_select %p48, 0, %s47
      %s50 = sadd.s32 1, %s34
      %s51 = scalar_select %p48, %s50, %s34
      %p52 = scmp.ge.s32.totalorder %s51, 2
      %s53 = scalar_select %p52, 0, %s51
      %s54 = ssub.s32 %s34, %s53
      %s55 = ssub.s32 %s35, %s49
      %s56 = sor.u32 %s54, %s55
      %p57 = scmp.eq.s32.totalorder %s56, 0
      %s59 = sadd.s32 %s58, 1
      %s60 = scalar_select %p57, %s58, %s59
      %p63 = pneg %p57
      %p64 = scmp.eq.s32.totalorder %s27, 7
      %p65 = por %p63, %p64
      %p66 = scmp.ne.s32.totalorder %s58, %s61
      %p67 = scmp.eq.s32.totalorder %s27, 0
      %p68 = por %p66, %p67
      %p69 = scmp.ne.s32.totalorder %s58, %s61
      %p70 = scmp.eq.s32.totalorder %s32, 7
      %p71 = por %p69, %p70
      %p72 = scmp.ne.s32.totalorder %s61, %s62
      %p73 = scmp.eq.s32.totalorder %s32, 0
      %p74 = por %p72, %p73
      %p75 = scmp.ne.s32.totalorder %s61, %s62
      %p76 = scmp.eq.s32.totalorder %s33, 7
      %p77 = por %p75, %p76
      %p79 = scmp.ne.s32.totalorder %s62, %s78
      %p80 = scmp.eq.s32.totalorder %s33, 0
      %p81 = por %p79, %p80
      %s82 = ssub.s32 %s34, %s53
      %s83 = ssub.s32 %s36, %s45
      %s84 = sor.u32 %s82, %s83
      %p85 = scmp.eq.s32.totalorder %s84, 0
      %s87 = sadd.s32 %s86, 1
      %s88 = scalar_select %p85, %s86, %s87
      %p91 = pneg %p85
      %p92 = scmp.eq.s32.totalorder %s27, 7
      %p93 = por %p91, %p92
      %p94 = scmp.ne.s32.totalorder %s86, %s89
      %p95 = scmp.eq.s32.totalorder %s27, 0
      %p96 = por %p94, %p95
      %p97 = scmp.ne.s32.totalorder %s86, %s89
      %p98 = scmp.eq.s32.totalorder %s32, 7
      %p99 = por %p97, %p98
      %p100 = scmp.ne.s32.totalorder %s89, %s90
      %p101 = scmp.eq.s32.totalorder %s32, 0
      %p102 = por %p100, %p101
      %p103 = scmp.ne.s32.totalorder %s89, %s90
      %p104 = scmp.eq.s32.totalorder %s33, 7
      %p105 = por %p103, %p104
      %p107 = scmp.ne.s32.totalorder %s90, %s106
      %p108 = scmp.eq.s32.totalorder %s33, 0
      %p109 = por %p107, %p108
      %s111 = sadd.s32 %s110, 1
      %p114 = scmp.eq.s32.totalorder %s27, 7
      %p115 = scmp.ne.s32.totalorder %s110, %s112
      %p116 = scmp.eq.s32.totalorder %s27, 0
      %p117 = por %p115, %p116
      %p118 = scmp.ne.s32.totalorder %s110, %s112
      %p119 = scmp.eq.s32.totalorder %s32, 7
      %p120 = por %p118, %p119
      %p121 = scmp.ne.s32.totalorder %s112, %s113
      %p122 = scmp.eq.s32.totalorder %s32, 0
      %p123 = por %p121, %p122
      %p124 = scmp.ne.s32.totalorder %s112, %s113
      %p125 = scmp.eq.s32.totalorder %s33, 7
      %p126 = por %p124, %p125
      %p128 = scmp.ne.s32.totalorder %s113, %s127
      %p129 = scmp.eq.s32.totalorder %s33, 0
      %p130 = por %p128, %p129
      %s132 = sadd.s32 %s131, 1
      %p135 = scmp.eq.s32.totalorder %s27, 7
      %p136 = scmp.ne.s32.totalorder %s131, %s133
      %p137 = scmp.eq.s32.totalorder %s27, 0
      %p138 = por %p136, %p137
      %p139 = scmp.ne.s32.totalorder %s131, %s133
      %p140 = scmp.eq.s32.totalorder %s32, 7
      %p141 = por %p139, %p140
      %p142 = scmp.ne.s32.totalorder %s133, %s134
      %p143 = scmp.eq.s32.totalorder %s32, 0
      %p144 = por %p142, %p143
      %p145 = scmp.ne.s32.totalorder %s133, %s134
      %p146 = scmp.eq.s32.totalorder %s33, 7
      %p147 = por %p145, %p146
      %p149 = scmp.ne.s32.totalorder %s134, %s148
      %p150 = scmp.eq.s32.totalorder %s33, 0
      %p151 = por %p149, %p150
      %s153 = sadd.s32 %s152, 1
      %p156 = scmp.eq.s32.totalorder %s27, 7
      %p157 = scmp.ne.s32.totalorder %s152, %s154
      %p158 = scmp.eq.s32.totalorder %s27, 0
      %p159 = por %p157, %p158
      %p160 = scmp.ne.s32.totalorder %s152, %s154
      %p161 = scmp.eq.s32.totalorder %s32, 7
      %p162 = por %p160, %p161
      %p163 = scmp.ne.s32.totalorder %s154, %s155
      %p164 = scmp.eq.s32.totalorder %s32, 0
      %p165 = por %p163, %p164
      %p166 = scmp.ne.s32.totalorder %s154, %s155
      %p167 = scmp.eq.s32.totalorder %s33, 7
      %p168 = por %p166, %p167
      %p170 = scmp.ne.s32.totalorder %s155, %s169
      %p171 = scmp.eq.s32.totalorder %s33, 0
      %p172 = por %p170, %p171
      %s174 = sadd.s32 %s173, 1
      %p177 = scmp.eq.s32.totalorder %s27, 7
      %p178 = scmp.ne.s32.totalorder %s173, %s175
      %p179 = scmp.eq.s32.totalorder %s27, 0
      %p180 = por %p178, %p179
      %p181 = scmp.ne.s32.totalorder %s173, %s175
      %p182 = scmp.eq.s32.totalorder %s32, 7
      %p183 = por %p181, %p182
      %p184 = scmp.ne.s32.totalorder %s175, %s176
      %p185 = scmp.eq.s32.totalorder %s32, 0
      %p186 = por %p184, %p185
      %p187 = scmp.ne.s32.totalorder %s175, %s176
      %p188 = scmp.eq.s32.totalorder %s33, 7
      %p189 = por %p187, %p188
      %p191 = scmp.ne.s32.totalorder %s176, %s190
      %p192 = scmp.eq.s32.totalorder %s33, 0
      %p193 = por %p191, %p192
      %s195 = sadd.s32 %s194, 1
      %p198 = scmp.eq.s32.totalorder %s27, 7
      %p199 = scmp.ne.s32.totalorder %s194, %s196
      %p200 = scmp.eq.s32.totalorder %s27, 0
      %p201 = por %p199, %p200
      %p202 = scmp.ne.s32.totalorder %s194, %s196
      %p203 = scmp.eq.s32.totalorder %s32, 7
      %p204 = por %p202, %p203
      %p205 = scmp.ne.s32.totalorder %s196, %s197
      %p206 = scmp.eq.s32.totalorder %s32, 0
      %p207 = por %p205, %p206
      %p208 = scmp.ne.s32.totalorder %s196, %s197
      %p209 = scmp.eq.s32.totalorder %s33, 7
      %p210 = por %p208, %p209
      %p212 = scmp.ne.s32.totalorder %s197, %s211
      %p213 = scmp.eq.s32.totalorder %s33, 0
      %p214 = por %p212, %p213
      %s216 = sadd.s32 %s215, 1
      %p219 = scmp.eq.s32.totalorder %s27, 7
      %p220 = scmp.ne.s32.totalorder %s215, %s217
      %p221 = scmp.eq.s32.totalorder %s27, 0
      %p222 = por %p220, %p221
      %p223 = scmp.ne.s32.totalorder %s215, %s217
      %p224 = scmp.eq.s32.totalorder %s32, 7
      %p225 = por %p223, %p224
      %p226 = scmp.ne.s32.totalorder %s217, %s218
      %p227 = scmp.eq.s32.totalorder %s32, 0
      %p228 = por %p226, %p227
      %p229 = scmp.ne.s32.totalorder %s217, %s218
      %p230 = scmp.eq.s32.totalorder %s33, 7
      %p231 = por %p229, %p230
      %p233 = scmp.ne.s32.totalorder %s218, %s232
      %p234 = scmp.eq.s32.totalorder %s33, 0
      %p235 = por %p233, %p234
      %s237 = sadd.s32 %s236, 1
      %p240 = scmp.eq.s32.totalorder %s27, 7
      %p241 = scmp.ne.s32.totalorder %s236, %s238
      %p242 = scmp.eq.s32.totalorder %s27, 0
      %p243 = por %p241, %p242
      %p244 = scmp.ne.s32.totalorder %s236, %s238
      %p245 = scmp.eq.s32.totalorder %s32, 7
      %p246 = por %p244, %p245
      %p247 = scmp.ne.s32.totalorder %s238, %s239
      %p248 = scmp.eq.s32.totalorder %s32, 0
      %p249 = por %p247, %p248
      %p250 = scmp.ne.s32.totalorder %s238, %s239
      %p251 = scmp.eq.s32.totalorder %s33, 7
      %p252 = por %p250, %p251
      %p254 = scmp.ne.s32.totalorder %s239, %s253
      %p255 = scmp.eq.s32.totalorder %s33, 0
      %p256 = por %p254, %p255
      %s258 = sadd.s32 %s257, 1
      %p261 = scmp.eq.s32.totalorder %s27, 7
      %p262 = scmp.ne.s32.totalorder %s257, %s259
      %p263 = scmp.eq.s32.totalorder %s27, 0
      %p264 = por %p262, %p263
      %p265 = scmp.ne.s32.totalorder %s257, %s259
      %p266 = scmp.eq.s32.totalorder %s32, 7
      %p267 = por %p265, %p266
      %p268 = scmp.ne.s32.totalorder %s259, %s260
      %p269 = scmp.eq.s32.totalorder %s32, 0
      %p270 = por %p268, %p269
      %p271 = scmp.ne.s32.totalorder %s259, %s260
      %p272 = scmp.eq.s32.totalorder %s33, 7
      %p273 = por %p271, %p272
      %p275 = scmp.ne.s32.totalorder %s260, %s274
      %p276 = scmp.eq.s32.totalorder %s33, 0
      %p277 = por %p275, %p276
      %s279 = sadd.s32 %s278, 1
      %p282 = scmp.eq.s32.totalorder %s27, 7
      %p283 = scmp.ne.s32.totalorder %s278, %s280
      %p284 = scmp.eq.s32.totalorder %s27, 0
      %p285 = por %p283, %p284
      %p286 = scmp.ne.s32.totalorder %s278, %s280
      %p287 = scmp.eq.s32.totalorder %s32, 7
      %p288 = por %p286, %p287
      %p289 = scmp.ne.s32.totalorder %s280, %s281
      %p290 = scmp.eq.s32.totalorder %s32, 0
      %p291 = por %p289, %p290
      %p292 = scmp.ne.s32.totalorder %s280, %s281
      %p293 = scmp.eq.s32.totalorder %s33, 7
      %p294 = por %p292, %p293
      %p296 = scmp.ne.s32.totalorder %s281, %s295
      %p297 = scmp.eq.s32.totalorder %s33, 0
      %p298 = por %p296, %p297
      %s300 = sadd.s32 %s299, 1
      %p303 = scmp.eq.s32.totalorder %s27, 7
      %p304 = scmp.ne.s32.totalorder %s299, %s301
      %p305 = scmp.eq.s32.totalorder %s27, 0
      %p306 = por %p304, %p305
      %p307 = scmp.ne.s32.totalorder %s299, %s301
      %p308 = scmp.eq.s32.totalorder %s32, 7
      %p309 = por %p307, %p308
      %p310 = scmp.ne.s32.totalorder %s301, %s302
      %p311 = scmp.eq.s32.totalorder %s32, 0
      %p312 = por %p310, %p311
      %p313 = scmp.ne.s32.totalorder %s301, %s302
      %p314 = scmp.eq.s32.totalorder %s33, 7
      %p315 = por %p313, %p314
      %p317 = scmp.ne.s32.totalorder %s302, %s316
      %p318 = scmp.eq.s32.totalorder %s33, 0
      %p319 = por %p317, %p318
      %s321 = sadd.s32 %s320, 1
      %p324 = scmp.eq.s32.totalorder %s27, 7
      %p325 = scmp.ne.s32.totalorder %s320, %s322
      %p326 = scmp.eq.s32.totalorder %s27, 0
      %p327 = por %p325, %p326
      %p328 = scmp.ne.s32.totalorder %s320, %s322
      %p329 = scmp.eq.s32.totalorder %s32, 7
      %p330 = por %p328, %p329
      %p331 = scmp.ne.s32.totalorder %s322, %s323
      %p332 = scmp.eq.s32.totalorder %s32, 0
      %p333 = por %p331, %p332
      %p334 = scmp.ne.s32.totalorder %s322, %s323
      %p335 = scmp.eq.s32.totalorder %s33, 7
      %p336 = por %p334, %p335
      %p338 = scmp.ne.s32.totalorder %s323, %s337
      %p339 = scmp.eq.s32.totalorder %s33, 0
      %p340 = por %p338, %p339
      %s342 = sadd.s32 %s341, 1
      %p345 = scmp.eq.s32.totalorder %s27, 7
      %p346 = scmp.ne.s32.totalorder %s341, %s343
      %p347 = scmp.eq.s32.totalorder %s27, 0
      %p348 = por %p346, %p347
      %p349 = scmp.ne.s32.totalorder %s341, %s343
      %p350 = scmp.eq.s32.totalorder %s32, 7
      %p351 = por %p349, %p350
      %p352 = scmp.ne.s32.totalorder %s343, %s344
      %p353 = scmp.eq.s32.totalorder %s32, 0
      %p354 = por %p352, %p353
      %p355 = scmp.ne.s32.totalorder %s343, %s344
      %p356 = scmp.eq.s32.totalorder %s33, 7
      %p357 = por %p355, %p356
      %p359 = scmp.ne.s32.totalorder %s344, %s358
      %p360 = scmp.eq.s32.totalorder %s33, 0
      %p361 = por %p359, %p360
      %s363 = sadd.s32 %s362, 1
      %p366 = scmp.eq.s32.totalorder %s27, 7
      %p367 = scmp.ne.s32.totalorder %s362, %s364
      %p368 = scmp.eq.s32.totalorder %s27, 0
      %p369 = por %p367, %p368
      %p370 = scmp.ne.s32.totalorder %s362, %s364
      %p371 = scmp.eq.s32.totalorder %s32, 7
      %p372 = por %p370, %p371
      %p373 = scmp.ne.s32.totalorder %s364, %s365
      %p374 = scmp.eq.s32.totalorder %s32, 0
      %p375 = por %p373, %p374
      %p376 = scmp.ne.s32.totalorder %s364, %s365
      %p377 = scmp.eq.s32.totalorder %s33, 7
      %p378 = por %p376, %p377
      %p380 = scmp.ne.s32.totalorder %s365, %s379
      %p381 = scmp.eq.s32.totalorder %s33, 0
      %p382 = por %p380, %p381
      %s383 = ssub.s32 %s34, %s53
      %s384 = ssub.s32 %s35, %s49
      %s385 = sor.u32 %s383, %s384
      %p386 = scmp.eq.s32.totalorder %s385, 0
      %s388 = sadd.s32 %s387, 1
      %s389 = scalar_select %p386, %s387, %s388
      %p392 = pneg %p386
      %p393 = scmp.eq.s32.totalorder %s27, 7
      %p394 = por %p392, %p393
      %p395 = scmp.ne.s32.totalorder %s387, %s390
      %p396 = scmp.eq.s32.totalorder %s27, 0
      %p397 = por %p395, %p396
      %p398 = scmp.ne.s32.totalorder %s387, %s390
      %p399 = scmp.eq.s32.totalorder %s32, 7
      %p400 = por %p398, %p399
      %p401 = scmp.ne.s32.totalorder %s390, %s391
      %p402 = scmp.eq.s32.totalorder %s32, 0
      %p403 = por %p401, %p402
      %p404 = scmp.ne.s32.totalorder %s390, %s391
      %p405 = scmp.eq.s32.totalorder %s33, 7
      %p406 = por %p404, %p405
      %p408 = scmp.ne.s32.totalorder %s391, %s407
      %p409 = scmp.eq.s32.totalorder %s33, 0
      %p410 = por %p408, %p409
      %p411 = scmp.le.s32.totalorder 1, %s27
      %p412 = scmp.lt.s32.totalorder %s27, 9
      %p413 = pnand %p411, %p412
      %p414 = pneg %p413
      // Predicated region
      $region9: #{tpu_custom_call.1} parent=5 // pred_check
        _
      $region10: #{tpu_custom_call.1} parent=5 // pred_check_branch
        %416 = sbr.rel (%p413) target = $region12
      $region11: #{tpu_custom_call.1} parent=5 // pred_region
        %s417 = ssub.s32 %s27, 1
        // Predicated region
        $region13: #{tpu_custom_call.1} parent=11 // pred_check
          %p418 = pneg %p123
        $region14: #{tpu_custom_call.1} parent=11 // pred_check_branch
          %420 = sbr.rel (%p418) target = $region16
        $region15: #{tpu_custom_call.1} parent=11 // pred_region
          _
        $region16: #{tpu_custom_call.1} parent=11 // pred_fallthru
          _
        // Predicated region
        $region17: #{tpu_custom_call.1} parent=11 // pred_check
          %p421 = pneg %p144
        $region18: #{tpu_custom_call.1} parent=11 // pred_check_branch
          %423 = sbr.rel (%p421) target = $region20
        $region19: #{tpu_custom_call.1} parent=11 // pred_region
          %s425 = ssub.s32 256, 256
          %426 = vsyncadd [#allocation7], %s425
          %s427 = sshll.u32 [#allocation6], 4
          %s428 = int_to_ptr.vmem [resolvable:$true] %s427
          %433 = dma.hbm_to_vmem [thread:$0]  %s3, 256, %s428, [#allocation7], 64, 64, 4
        $region20: #{tpu_custom_call.1} parent=11 // pred_fallthru
          _
        // Predicated region
        $region21: #{tpu_custom_call.1} parent=11 // pred_check
          %p434 = pneg %p165
        $region22: #{tpu_custom_call.1} parent=11 // pred_check_branch
          %436 = sbr.rel (%p434) target = $region24
        $region23: #{tpu_custom_call.1} parent=11 // pred_region
          %s438 = ssub.s32 256, 256
          %439 = vsyncadd [#allocation10], %s438
          %s440 = sshll.u32 [#allocation9], 4
          %s441 = int_to_ptr.vmem [resolvable:$true] %s440
          %446 = dma.hbm_to_vmem [thread:$0]  %s4, 256, %s441, [#allocation10], 64, 64, 4
        $region24: #{tpu_custom_call.1} parent=11 // pred_fallthru
          _
        // Predicated region
        $region25: #{tpu_custom_call.1} parent=11 // pred_check
          %p447 = pneg %p186
        $region26: #{tpu_custom_call.1} parent=11 // pred_check_branch
          %449 = sbr.rel (%p447) target = $region28
        $region27: #{tpu_custom_call.1} parent=11 // pred_region
          %s451 = ssub.s32 256, 256
          %452 = vsyncadd [#allocation10], %s451
          %s453 = sshll.u32 [#allocation11], 4
          %s454 = int_to_ptr.vmem [resolvable:$true] %s453
          %459 = dma.hbm_to_vmem [thread:$0]  %s5, 256, %s454, [#allocation10], 64, 64, 4
        $region28: #{tpu_custom_call.1} parent=11 // pred_fallthru
          _
        // Predicated region
        $region29: #{tpu_custom_call.1} parent=11 // pred_check
          %p460 = pneg %p207
        $region30: #{tpu_custom_call.1} parent=11 // pred_check_branch
          %462 = sbr.rel (%p460) target = $region32
        $region31: #{tpu_custom_call.1} parent=11 // pred_region
          _
        $region32: #{tpu_custom_call.1} parent=11 // pred_fallthru
          _
        // Predicated region
        $region33: #{tpu_custom_call.1} parent=11 // pred_check
          %p463 = pneg %p228
        $region34: #{tpu_custom_call.1} parent=11 // pred_check_branch
          %465 = sbr.rel (%p463) target = $region36
        $region35: #{tpu_custom_call.1} parent=11 // pred_region
          %s467 = ssub.s32 256, 256
          %468 = vsyncadd [#allocation13], %s467
          %s469 = sshll.u32 [#allocation12], 4
          %s470 = int_to_ptr.vmem [resolvable:$true] %s469
          %475 = dma.hbm_to_vmem [thread:$0]  %s7, 256, %s470, [#allocation13], 64, 64, 4
        $region36: #{tpu_custom_call.1} parent=11 // pred_fallthru
          _
        // Predicated region
        $region37: #{tpu_custom_call.1} parent=11 // pred_check
          %p476 = pneg %p249
        $region38: #{tpu_custom_call.1} parent=11 // pred_check_branch
          %478 = sbr.rel (%p476) target = $region40
        $region39: #{tpu_custom_call.1} parent=11 // pred_region
          _
        $region40: #{tpu_custom_call.1} parent=11 // pred_fallthru
          _
        // Predicated region
        $region41: #{tpu_custom_call.1} parent=11 // pred_check
          %p479 = pneg %p270
        $region42: #{tpu_custom_call.1} parent=11 // pred_check_branch
          %481 = sbr.rel (%p479) target = $region44
        $region43: #{tpu_custom_call.1} parent=11 // pred_region
          _
        $region44: #{tpu_custom_call.1} parent=11 // pred_fallthru
          _
        // Predicated region
        $region45: #{tpu_custom_call.1} parent=11 // pred_check
          %p482 = pneg %p291
        $region46: #{tpu_custom_call.1} parent=11 // pred_check_branch
          %484 = sbr.rel (%p482) target = $region48
        $region47: #{tpu_custom_call.1} parent=11 // pred_region
          _
        $region48: #{tpu_custom_call.1} parent=11 // pred_fallthru
          _
        // Predicated region
        $region49: #{tpu_custom_call.1} parent=11 // pred_check
          %p485 = pneg %p312
        $region50: #{tpu_custom_call.1} parent=11 // pred_check_branch
          %487 = sbr.rel (%p485) target = $region52
        $region51: #{tpu_custom_call.1} parent=11 // pred_region
          _
        $region52: #{tpu_custom_call.1} parent=11 // pred_fallthru
          _
        // Predicated region
        $region53: #{tpu_custom_call.1} parent=11 // pred_check
          %p488 = pneg %p333
        $region54: #{tpu_custom_call.1} parent=11 // pred_check_branch
          %490 = sbr.rel (%p488) target = $region56
        $region55: #{tpu_custom_call.1} parent=11 // pred_region
          _
        $region56: #{tpu_custom_call.1} parent=11 // pred_fallthru
          _
        // Predicated region
        $region57: #{tpu_custom_call.1} parent=11 // pred_check
          %p491 = pneg %p354
        $region58: #{tpu_custom_call.1} parent=11 // pred_check_branch
          %493 = sbr.rel (%p491) target = $region60
        $region59: #{tpu_custom_call.1} parent=11 // pred_region
          _
        $region60: #{tpu_custom_call.1} parent=11 // pred_fallthru
          _
        // Predicated region
        $region61: #{tpu_custom_call.1} parent=11 // pred_check
          %p494 = pneg %p375
        $region62: #{tpu_custom_call.1} parent=11 // pred_check_branch
          %496 = sbr.rel (%p494) target = $region64
        $region63: #{tpu_custom_call.1} parent=11 // pred_region
          _
        $region64: #{tpu_custom_call.1} parent=11 // pred_fallthru
          _
      $region12: #{tpu_custom_call.1} parent=5 // pred_fallthru
        _
      %p497 = scmp.lt.s32.totalorder %s27, 8
      // Predicated region
      $region65: #{tpu_custom_call.1} parent=5 // pred_check
        %p498 = pneg %p497
      $region66: #{tpu_custom_call.1} parent=5 // pred_check_branch
        %500 = sbr.rel (%p498) target = $region68
      $region67: #{tpu_custom_call.1} parent=5 // pred_region
        // Predicated region
        $region69: #{tpu_custom_call.1} parent=67 // pred_check
          %p501 = pneg %p68
        $region70: #{tpu_custom_call.1} parent=67 // pred_check_branch
          %503 = sbr.rel (%p501) target = $region72
        $region71: #{tpu_custom_call.1} parent=67 // pred_region
          %p504 = scmp.lt.s32.totalorder %s34, 1
          %s505 = scalar_select %p504, %s34, 1
          %p506 = scmp.lt.s32.totalorder %s35, 1
          %s507 = scalar_select %p506, %s35, 1
          %s508 = smul.addr %s505, 2
          %s509 = sadd.s32 %s507, %s508
          %s510 = smul.addr %s509, 8
          %s511 = scalar_lea.vmem %s0, %s510
        $region72: #{tpu_custom_call.1} parent=67 // pred_fallthru
          _
        // Predicated region
        $region73: #{tpu_custom_call.1} parent=67 // pred_check
          %p512 = pneg %p96
        $region74: #{tpu_custom_call.1} parent=67 // pred_check_branch
          %514 = sbr.rel (%p512) target = $region76
        $region75: #{tpu_custom_call.1} parent=67 // pred_region
          %p515 = scmp.lt.s32.totalorder %s34, 1
          %s516 = scalar_select %p515, %s34, 1
          %p517 = scmp.lt.s32.totalorder %s36, 1
          %s518 = scalar_select %p517, %s36, 1
          %s519 = smul.addr %s516, 2
          %s520 = sadd.s32 %s518, %s519
          %s521 = smul.addr %s520, 8
          %s522 = scalar_lea.vmem %s1, %s521
        $region76: #{tpu_custom_call.1} parent=67 // pred_fallthru
          _
      $region68: #{tpu_custom_call.1} parent=5 // pred_fallthru
        _
      %p523 = scmp.le.s32.totalorder 1, %s27
      %p524 = scmp.lt.s32.totalorder %s27, 9
      %p525 = pnand %p523, %p524
      %p526 = pneg %p525
      // Predicated region
      $region77: #{tpu_custom_call.1} parent=5 // pred_check
        _
      $region78: #{tpu_custom_call.1} parent=5 // pred_check_branch
        %528 = sbr.rel (%p525) target = $region80
      $region79: #{tpu_custom_call.1} parent=5 // pred_region
        %s529 = ssub.s32 %s27, 1
        // Predicated region
        $region81: #{tpu_custom_call.1} parent=79 // pred_check
          %p530 = pneg %p144
        $region82: #{tpu_custom_call.1} parent=79 // pred_check_branch
          %532 = sbr.rel (%p530) target = $region84
        $region83: #{tpu_custom_call.1} parent=79 // pred_region
          %533 = dma.done [#allocation7], 256
        $region84: #{tpu_custom_call.1} parent=79 // pred_fallthru
          _
        // Predicated region
        $region85: #{tpu_custom_call.1} parent=79 // pred_check
          %p534 = pneg %p165
        $region86: #{tpu_custom_call.1} parent=79 // pred_check_branch
          %536 = sbr.rel (%p534) target = $region88
        $region87: #{tpu_custom_call.1} parent=79 // pred_region
          %537 = dma.done [#allocation10], 256
        $region88: #{tpu_custom_call.1} parent=79 // pred_fallthru
          _
        // Predicated region
        $region89: #{tpu_custom_call.1} parent=79 // pred_check
          %p538 = pneg %p186
        $region90: #{tpu_custom_call.1} parent=79 // pred_check_branch
          %540 = sbr.rel (%p538) target = $region92
        $region91: #{tpu_custom_call.1} parent=79 // pred_region
          %541 = dma.done [#allocation10], 256
        $region92: #{tpu_custom_call.1} parent=79 // pred_fallthru
          _
        // Predicated region
        $region93: #{tpu_custom_call.1} parent=79 // pred_check
          %p542 = pneg %p228
        $region94: #{tpu_custom_call.1} parent=79 // pred_check_branch
          %544 = sbr.rel (%p542) target = $region96
        $region95: #{tpu_custom_call.1} parent=79 // pred_region
          %545 = dma.done [#allocation13], 256
        $region96: #{tpu_custom_call.1} parent=79 // pred_fallthru
          _
        %p546 = scmp.lt.s32.totalorder %s37, 1
        %s547 = scalar_select %p546, %s37, 1
        %p548 = scmp.lt.s32.totalorder %s38, 1
        %s549 = scalar_select %p548, %s38, 1
        %s550 = smul.addr %s547, 2
        %s551 = sadd.s32 %s549, %s550
        %s552 = smul.addr %s551, 8
        %s553 = scalar_lea.vmem %s0, %s552
        %p554 = pneg %p74
        %p555 = pneg %p71
        %p556 = scmp.lt.s32.totalorder %s37, 1
        %s557 = scalar_select %p556, %s37, 1
        %p558 = scmp.lt.s32.totalorder %s39, 1
        %s559 = scalar_select %p558, %s39, 1
        %s560 = smul.addr %s557, 2
        %s561 = sadd.s32 %s559, %s560
        %s562 = smul.addr %s561, 8
        %s563 = scalar_lea.vmem %s1, %s562
        %p564 = pneg %p102
        %p565 = pneg %p99
        %p566 = pneg %p123
        %p567 = pneg %p120
        %p568 = pneg %p144
        %p569 = pneg %p141
        %p570 = pneg %p165
        %p571 = pneg %p162
        %p572 = pneg %p186
        %p573 = pneg %p183
        %p574 = pneg %p207
        %p575 = pneg %p204
        %p576 = pneg %p228
        %p577 = pneg %p225
        %p578 = pneg %p249
        %p579 = pneg %p246
        %p580 = pneg %p270
        %p581 = pneg %p267
        %p582 = pneg %p291
        %p583 = pneg %p288
        %p584 = pneg %p312
        %p585 = pneg %p309
        %p586 = pneg %p333
        %p587 = pneg %p330
        %p588 = pneg %p354
        %p589 = pneg %p351
        %p590 = pneg %p375
        %p591 = pneg %p372
        %p592 = pneg %p403
        %p593 = pneg %p400
        %s594 = sand.u32 %s390, 1
        %s595 = scalar_lea.sflag [#allocation8], %s594
        %s596 = sand.u32 %s390, 1
        %s597 = smul.addr %s596, 8
        %s598 = scalar_lea.vmem [#allocation14], %s597
        %p599 = scmp.lt.s32.totalorder %s37, 1
        %s600 = scalar_select %p599, %s37, 1
        %p601 = scmp.lt.s32.totalorder %s38, 1
        %s602 = scalar_select %p601, %s38, 1
        %s603 = smul.addr %s600, 2
        %s604 = sadd.s32 %s602, %s603
        %s605 = smul.addr %s604, 8
        %s606 = scalar_lea.vmem %s0, %s605
        %p607 = scmp.lt.s32.totalorder %s37, 1
        %s608 = scalar_select %p607, %s37, 1
        %p609 = scmp.lt.s32.totalorder %s39, 1
        %s610 = scalar_select %p609, %s39, 1
        %s611 = smul.addr %s608, 2
        %s612 = sadd.s32 %s610, %s611
        %s613 = smul.addr %s612, 8
        %s614 = scalar_lea.vmem %s1, %s613
        %p616 = scmp.eq.s32.totalorder %s39, 0
        // Predicated region
        $region97: #{tpu_custom_call.1} parent=79 // pred_check
          %p617 = pneg %p616
        $region98: #{tpu_custom_call.1} parent=79 // pred_check_branch
          %619 = sbr.rel (%p617) target = $region100
        $region99: #{tpu_custom_call.1} parent=79 // pred_region
          %vm620 = vcmask 7168
          %621 = vst.msk [vmem:[#allocation3] sm:$0xff] %vm620, -1e+30
          %622 = vst.msk [vmem:[#allocation3 + $0x8] sm:$0xff] %vm620, -1e+30
          %623 = vst.msk [vmem:[#allocation3 + $0x10] sm:$0xff] %vm620, -1e+30
          %624 = vst.msk [vmem:[#allocation3 + $0x18] sm:$0xff] %vm620, -1e+30
          %625 = vst.msk [vmem:[#allocation4] sm:$0xff] %vm620, 0.0
          %626 = vst.msk [vmem:[#allocation4 + $0x8] sm:$0xff] %vm620, 0.0
          %627 = vst.msk [vmem:[#allocation4 + $0x10] sm:$0xff] %vm620, 0.0
          %628 = vst.msk [vmem:[#allocation4 + $0x18] sm:$0xff] %vm620, 0.0
          %vm629 = vcmask 64512
          %630 = vst.msk [vmem:[#allocation5] sm:$0xff] %vm629, 0.0
          %631 = vst.msk [vmem:[#allocation5 + $0x8] sm:$0xff] %vm629, 0.0
          %632 = vst.msk [vmem:[#allocation5 + $0x10] sm:$0xff] %vm629, 0.0
          %633 = vst.msk [vmem:[#allocation5 + $0x18] sm:$0xff] %vm629, 0.0
          %v634 = vld [vmem:[%s606] sm:$0xff]
          %v635 = vld [vmem:[%s11] sm:$0x1]
          %v636 = vld [vmem:[%s12] sm:$0x1]
          %vm637 = vcmask 261120
          %v638 = vsel %vm637, %v634, 0.0
          %639 = vadd.xlane.f32.xlu0 %v638
          %v640 = vpop.xlane.xlu0 %639
          %v641 = vmul.f32 %v634, %v634
          %v642 = vsel %vm637, %v641, 0.0
          %643 = vadd.xlane.f32.xlu0 %v642
          %v644 = vpop.xlane.xlu0 %643
          %v645 = vrcp.pop 32.0
          %v646 = vmul.f32 %v640, %v645
          %v647 = vmul.f32 %v644, %v645
          %v648 = vmul.f32 %v646, %v646
          %v649 = vsub.f32 %v647, %v648
          %v650 = vadd.f32 %v649, 1e-05
          %v651 = vrsqrt.pop %v650
          %v652 = vsub.f32 %v634, %v646
          %v653 = vmul.f32 %v652, %v651
          %v655 = vlaneseq
          %v656 = vshrl.u32 %v655, 7
          %v657 = vsub.s32 0, %v656
          %v658 = vrot.slane %v635, %v657
          %v660 = vmul.f32 %v653, %v658
          %v662 = vlaneseq
          %v663 = vshrl.u32 %v662, 7
          %v664 = vsub.s32 0, %v663
          %v665 = vrot.slane %v636, %v664
          %v667 = vadd.f32 %v660, %v665
          %v668 = vpack.c.bf16 %v667, %v667
          %v669 = vld [vmem:[%s2] sm:$0xf]
          %v670 = vld [vmem:[%s2 + $0x4] sm:$0xf]
          %v671 = vld [vmem:[%s2 + $0x8] sm:$0xf]
          %v672 = vld [vmem:[%s2 + $0xc] sm:$0xf]
          %v677 = vunpack.c.l.b16 %v669
          %v678 = vunpack.c.l.b16 %v670
          %v679 = vunpack.c.l.b16 %v671
          %v680 = vunpack.c.l.b16 %v672
          %v681 = vpack.c.b16 %v678, %v677
          %v682 = vpack.c.b16 %v680, %v679
          %v686 = vsel %vm637, %v668, 0
          %688 = vmatprep.subr.bf16.mxu0 0
          %689 = vmatpush1.bf16.msra.mxu0 %v681
          %690 = vmatprep.subr.bf16.mxu0 0
          %691 = vmatpush1.bf16.msra.mxu0 %v682
          %692 = vmatprep.subr.bf16.mxu0 0
          %693 = vmatpush1.bf16.msra.mxu0 0
          %694 = vmatprep.subr.bf16.mxu0 0
          %695 = vmatpush1.bf16.msra.mxu0 0
          %696 = vmatprep.subr.bf16.mxu0 0
          %697 = vmatpush1.bf16.msra.mxu0 0
          %698 = vmatprep.subr.bf16.mxu0 0
          %699 = vmatpush1.bf16.msra.mxu0 0
          %700 = vmatprep.subr.bf16.mxu0 0
          %701 = vmatpush1.bf16.msra.mxu0 0
          %702 = vmatprep.subr.bf16.mxu0 0
          %703 = vmatpush1.bf16.msra.mxu0 0
          %704 = vmatprep.subr.bf16.mxu0 0
          %705 = vmatpush1.bf16.msra.mxu0 0
          %706 = vmatprep.subr.bf16.mxu0 0
          %707 = vmatpush1.bf16.msra.mxu0 0
          %708 = vmatprep.subr.bf16.mxu0 0
          %709 = vmatpush1.bf16.msra.mxu0 0
          %710 = vmatprep.subr.bf16.mxu0 0
          %711 = vmatpush1.bf16.msra.mxu0 0
          %712 = vmatprep.subr.bf16.mxu0 0
          %713 = vmatpush1.bf16.msra.mxu0 0
          %714 = vmatprep.subr.bf16.mxu0 0
          %715 = vmatpush1.bf16.msra.mxu0 0
          %716 = vmatprep.subr.bf16.mxu0 0
          %717 = vmatpush1.bf16.msra.mxu0 0
          %718 = vmatprep.subr.bf16.mxu0 0
          %719 = vmatpush1.bf16.msra.mxu0 0
          %720 = vmatprep.mubr.bf16.mxu0 0
          %721 = vmatmul.mubr.bf16.gmra.mrb[0].mxu0 %v686
          %v722 = vpop.f32.mrb[0].mxu0
          %v723 = vadd.f32 0.0, %v722
          %v724 = vpop.f32.mrb[0].mxu0
          %v725 = vpop.f32.mrb[0].mxu0
          %v726 = vpop.f32.mrb[0].mxu0
          %727 = vdwg.mxu0
          %v728 = vmul.f32 %v723, 0.35355338
          %v729 = vpack.c.bf16 %v728, %v728
          %vm730 = vcmask 257024
          %731 = vst.msk [vmem:[#allocation2] sm:$0xf] %vm730, %v729
        $region100: #{tpu_custom_call.1} parent=79 // pred_fallthru
          _
        %s732 = smul.u32 %s39, 8
        %s733 = smul.u32 %s38, 8
        %s734 = sadd.s32 %s733, 7
        %p735 = scmp.le.s32.totalorder %s732, %s734
        // Predicated region
        $region101: #{tpu_custom_call.1} parent=79 // pred_check
          %p736 = pneg %p735
        $region102: #{tpu_custom_call.1} parent=79 // pred_check_branch
          %738 = sbr.rel (%p736) target = $region104
        $region103: #{tpu_custom_call.1} parent=79 // pred_region
          %v739 = vld [vmem:[%s614] sm:$0xff]
          %v740 = vld [vmem:[%s11] sm:$0x1]
          %v741 = vld [vmem:[%s12] sm:$0x1]
          %vm742 = vcmask 261120
          %v743 = vsel %vm742, %v739, 0.0
          %744 = vadd.xlane.f32.xlu0 %v743
          %v745 = vpop.xlane.xlu0 %744
          %v746 = vmul.f32 %v739, %v739
          %v747 = vsel %vm742, %v746, 0.0
          %748 = vadd.xlane.f32.xlu0 %v747
          %v749 = vpop.xlane.xlu0 %748
          %v750 = vrcp.pop 32.0
          %v751 = vmul.f32 %v745, %v750
          %v752 = vmul.f32 %v749, %v750
          %v753 = vmul.f32 %v751, %v751
          %v754 = vsub.f32 %v752, %v753
          %v755 = vadd.f32 %v754, 1e-05
          %v756 = vrsqrt.pop %v755
          %v757 = vsub.f32 %v739, %v751
          %v758 = vmul.f32 %v757, %v756
          %v760 = vlaneseq
          %v761 = vshrl.u32 %v760, 7
          %v762 = vsub.s32 0, %v761
          %v763 = vrot.slane %v740, %v762
          %v765 = vmul.f32 %v758, %v763
          %v767 = vlaneseq
          %v768 = vshrl.u32 %v767, 7
          %v769 = vsub.s32 0, %v768
          %v770 = vrot.slane %v741, %v769
          %v772 = vadd.f32 %v765, %v770
          %v773 = vpack.c.bf16 %v772, %v772
          %v774 = vld [vmem:[#allocation6] sm:$0xf]
          %v775 = vld [vmem:[#allocation6 + $0x4] sm:$0xf]
          %v776 = vld [vmem:[#allocation6 + $0x8] sm:$0xf]
          %v777 = vld [vmem:[#allocation6 + $0xc] sm:$0xf]
          %v782 = vunpack.c.l.b16 %v774
          %v783 = vunpack.c.l.b16 %v775
          %v784 = vunpack.c.l.b16 %v776
          %v785 = vunpack.c.l.b16 %v777
          %v786 = vpack.c.b16 %v783, %v782
          %v787 = vpack.c.b16 %v785, %v784
          %v791 = vsel %vm742, %v773, 0
          %793 = vmatprep.subr.bf16.mxu0 0
          %794 = vmatpush1.bf16.msra.mxu0 %v786
          %795 = vmatprep.subr.bf16.mxu0 0
          %796 = vmatpush1.bf16.msra.mxu0 %v787
          %797 = vmatprep.subr.bf16.mxu0 0
          %798 = vmatpush1.bf16.msra.mxu0 0
          %799 = vmatprep.subr.bf16.mxu0 0
          %800 = vmatpush1.bf16.msra.mxu0 0
          %801 = vmatprep.subr.bf16.mxu0 0
          %802 = vmatpush1.bf16.msra.mxu0 0
          %803 = vmatprep.subr.bf16.mxu0 0
          %804 = vmatpush1.bf16.msra.mxu0 0
          %805 = vmatprep.subr.bf16.mxu0 0
          %806 = vmatpush1.bf16.msra.mxu0 0
          %807 = vmatprep.subr.bf16.mxu0 0
          %808 = vmatpush1.bf16.msra.mxu0 0
          %809 = vmatprep.subr.bf16.mxu0 0
          %810 = vmatpush1.bf16.msra.mxu0 0
          %811 = vmatprep.subr.bf16.mxu0 0
          %812 = vmatpush1.bf16.msra.mxu0 0
          %813 = vmatprep.subr.bf16.mxu0 0
          %814 = vmatpush1.bf16.msra.mxu0 0
          %815 = vmatprep.subr.bf16.mxu0 0
          %816 = vmatpush1.bf16.msra.mxu0 0
          %817 = vmatprep.subr.bf16.mxu0 0
          %818 = vmatpush1.bf16.msra.mxu0 0
          %819 = vmatprep.subr.bf16.mxu0 0
          %820 = vmatpush1.bf16.msra.mxu0 0
          %821 = vmatprep.subr.bf16.mxu0 0
          %822 = vmatpush1.bf16.msra.mxu0 0
          %823 = vmatprep.subr.bf16.mxu0 0
          %824 = vmatpush1.bf16.msra.mxu0 0
          %825 = vmatprep.mubr.bf16.mxu0 0
          %826 = vmatmul.mubr.bf16.gmra.mrb[0].mxu0 %v791
          %v827 = vpop.f32.mrb[0].mxu0
          %v828 = vadd.f32 0.0, %v827
          %v829 = vpop.f32.mrb[0].mxu0
          %v830 = vpop.f32.mrb[0].mxu0
          %v831 = vpop.f32.mrb[0].mxu0
          %832 = vdwg.mxu0
          %v833 = vpack.c.bf16 %v828, %v828
          %v834 = vld [vmem:[#allocation9] sm:$0xf]
          %v835 = vld [vmem:[#allocation9 + $0x4] sm:$0xf]
          %v836 = vld [vmem:[#allocation9 + $0x8] sm:$0xf]
          %v837 = vld [vmem:[#allocation9 + $0xc] sm:$0xf]
          %v842 = vunpack.c.l.b16 %v834
          %v843 = vunpack.c.l.b16 %v835
          %v844 = vunpack.c.l.b16 %v836
          %v845 = vunpack.c.l.b16 %v837
          %v846 = vpack.c.b16 %v843, %v842
          %v847 = vpack.c.b16 %v845, %v844
          %850 = vmatprep.subr.bf16.mxu0 0
          %851 = vmatpush1.bf16.msra.mxu0 %v846
          %852 = vmatprep.subr.bf16.mxu0 0
          %853 = vmatpush1.bf16.msra.mxu0 %v847
          %854 = vmatprep.subr.bf16.mxu0 0
          %855 = vmatpush1.bf16.msra.mxu0 0
          %856 = vmatprep.subr.bf16.mxu0 0
          %857 = vmatpush1.bf16.msra.mxu0 0
          %858 = vmatprep.subr.bf16.mxu0 0
          %859 = vmatpush1.bf16.msra.mxu0 0
          %860 = vmatprep.subr.bf16.mxu0 0
          %861 = vmatpush1.bf16.msra.mxu0 0
          %862 = vmatprep.subr.bf16.mxu0 0
          %863 = vmatpush1.bf16.msra.mxu0 0
          %864 = vmatprep.subr.bf16.mxu0 0
          %865 = vmatpush1.bf16.msra.mxu0 0
          %866 = vmatprep.subr.bf16.mxu0 0
          %867 = vmatpush1.bf16.msra.mxu0 0
          %868 = vmatprep.subr.bf16.mxu0 0
          %869 = vmatpush1.bf16.msra.mxu0 0
          %870 = vmatprep.subr.bf16.mxu0 0
          %871 = vmatpush1.bf16.msra.mxu0 0
          %872 = vmatprep.subr.bf16.mxu0 0
          %873 = vmatpush1.bf16.msra.mxu0 0
          %874 = vmatprep.subr.bf16.mxu0 0
          %875 = vmatpush1.bf16.msra.mxu0 0
          %876 = vmatprep.subr.bf16.mxu0 0
          %877 = vmatpush1.bf16.msra.mxu0 0
          %878 = vmatprep.subr.bf16.mxu0 0
          %879 = vmatpush1.bf16.msra.mxu0 0
          %880 = vmatprep.subr.bf16.mxu0 0
          %881 = vmatpush1.bf16.msra.mxu0 0
          %882 = vmatprep.mubr.bf16.mxu0 0
          %883 = vmatmul.mubr.bf16.gmra.mrb[0].mxu0 %v791
          %v884 = vpop.f32.mrb[0].mxu0
          %v885 = vadd.f32 0.0, %v884
          %v886 = vpop.f32.mrb[0].mxu0
          %v887 = vpop.f32.mrb[0].mxu0
          %v888 = vpop.f32.mrb[0].mxu0
          %889 = vdwg.mxu0
          %v890 = vpack.c.bf16 %v885, %v885
          %v891 = vld [vmem:[#allocation2] sm:$0xf]
          %v892 = vlaneseq
          %v893 = vshrl.u32 %v892, 7
          %v894 = vstv %s733
          %v895 = vadd.s32 %v894, %v893
          %v896 = vlaneseq
          %v897 = vand.u32 %v896, 127
          %v898 = vstv %s732
          %v899 = vadd.s32 %v898, %v897
          %vm900 = vcmp.gt.s32.totalorder %v899, %v895
          %vm901 = vcmask 64512
          %v903 = vsel %vm901, %v891, 0
          %v906 = vsel %vm901, %v833, 0
          %908 = vmatprep.subr.bf16.mxu0 0
          %909 = vmatpush1.bf16.xpose.msra.mxu0 %v906
          %910 = vmatprep.subr.bf16.mxu0 0
          %911 = vmatpush1.bf16.xpose.msra.mxu0 0
          %912 = vmatprep.subr.bf16.mxu0 0
          %913 = vmatpush1.bf16.xpose.msra.mxu0 0
          %914 = vmatprep.subr.bf16.mxu0 0
          %915 = vmatpush1.bf16.xpose.msra.mxu0 0
          %916 = vmatprep.subr.bf16.mxu0 0
          %917 = vmatpush1.bf16.xpose.msra.mxu0 0
          %918 = vmatprep.subr.bf16.mxu0 0
          %919 = vmatpush1.bf16.xpose.msra.mxu0 0
          %920 = vmatprep.subr.bf16.mxu0 0
          %921 = vmatpush1.bf16.xpose.msra.mxu0 0
          %922 = vmatprep.subr.bf16.mxu0 0
          %923 = vmatpush1.bf16.xpose.msra.mxu0 0
          %924 = vmatprep.subr.bf16.mxu0 0
          %925 = vmatpush1.bf16.xpose.msra.mxu0 0
          %926 = vmatprep.subr.bf16.mxu0 0
          %927 = vmatpush1.bf16.xpose.msra.mxu0 0
          %928 = vmatprep.subr.bf16.mxu0 0
          %929 = vmatpush1.bf16.xpose.msra.mxu0 0
          %930 = vmatprep.subr.bf16.mxu0 0
          %931 = vmatpush1.bf16.xpose.msra.mxu0 0
          %932 = vmatprep.subr.bf16.mxu0 0
          %933 = vmatpush1.bf16.xpose.msra.mxu0 0
          %934 = vmatprep.subr.bf16.mxu0 0
          %935 = vmatpush1.bf16.xpose.msra.mxu0 0
          %936 = vmatprep.subr.bf16.mxu0 0
          %937 = vmatpush1.bf16.xpose.msra.mxu0 0
          %938 = vmatprep.subr.bf16.mxu0 0
          %939 = vmatpush1.bf16.xpose.msra.mxu0 0
          %940 = vmatprep.mubr.bf16.mxu0 0
          %941 = vmatmul.mubr.bf16.gmra.mrb[0].mxu0 %v903
          %v942 = vpop.f32.mrb[0].mxu0
          %v943 = vadd.f32 0.0, %v942
          %v944 = vpop.f32.mrb[0].mxu0
          %v945 = vpop.f32.mrb[0].mxu0
          %v946 = vpop.f32.mrb[0].mxu0
          %947 = vdwg.mxu0
          %v948 = vsel %vm900, -1e+30, %v943
          %v949 = vld [vmem:[#allocation3] sm:$0xff]
          %v950 = vsel %vm901, %v948, -inf
          %951 = vmax.xlane.f32.xlu0 %v950
          %v952 = vpop.xlane.xlu0 %951
          %v953 = vmax.f32 %v949, %v952
          %v954 = vsub.f32 %v949, %v953
          %v955 = vmul.f32 %v954, 1.442695
          %v956 = vpow.pop %v955
          %958 = vset.pattern.permute.xlu0 0
          %959 = vperm.xlu0 %958, %v953
          %v960 = vpop.permute.xlu0 %959
          %v962 = vsub.f32 %v948, %v960
          %v963 = vmul.f32 %v962, 1.442695
          %v964 = vpow.pop %v963
          %v965 = vld [vmem:[#allocation4] sm:$0xff]
          %v966 = vmul.f32 %v956, %v965
          %v967 = vsel %vm901, %v964, 0.0
          %968 = vadd.xlane.f32.xlu0 %v967
          %v969 = vpop.xlane.xlu0 %968
          %v970 = vadd.f32 %v966, %v969
          %vm971 = vcmask 7168
          %972 = vst.msk [vmem:[#allocation4] sm:$0xff] %vm971, %v970
          %v973 = vld [vmem:[#allocation5] sm:$0xff]
          %975 = vset.pattern.permute.xlu0 0
          %976 = vperm.xlu0 %975, %v956
          %v977 = vpop.permute.xlu0 %976
          %v979 = vmul.f32 %v977, %v973
          %v980 = vpack.c.bf16 %v964, %v964
          %v982 = vsel %vm901, %v980, 0
          %vm984 = vcmask 1043456
          %v986 = vsel %vm984, %v890, 0
          %988 = vmatprep.subr.bf16.mxu0 0
          %989 = vmatpush1.bf16.msra.mxu0 %v986
          %990 = vmatprep.subr.bf16.mxu0 0
          %991 = vmatpush1.bf16.msra.mxu0 0
          %992 = vmatprep.subr.bf16.mxu0 0
          %993 = vmatpush1.bf16.msra.mxu0 0
          %994 = vmatprep.subr.bf16.mxu0 0
          %995 = vmatpush1.bf16.msra.mxu0 0
          %996 = vmatprep.subr.bf16.mxu0 0
          %997 = vmatpush1.bf16.msra.mxu0 0
          %998 = vmatprep.subr.bf16.mxu0 0
          %999 = vmatpush1.bf16.msra.mxu0 0
          %1000 = vmatprep.subr.bf16.mxu0 0
          %1001 = vmatpush1.bf16.msra.mxu0 0
          %1002 = vmatprep.subr.bf16.mxu0 0
          %1003 = vmatpush1.bf16.msra.mxu0 0
          %1004 = vmatprep.subr.bf16.mxu0 0
          %1005 = vmatpush1.bf16.msra.mxu0 0
          %1006 = vmatprep.subr.bf16.mxu0 0
          %1007 = vmatpush1.bf16.msra.mxu0 0
          %1008 = vmatprep.subr.bf16.mxu0 0
          %1009 = vmatpush1.bf16.msra.mxu0 0
          %1010 = vmatprep.subr.bf16.mxu0 0
          %1011 = vmatpush1.bf16.msra.mxu0 0
          %1012 = vmatprep.subr.bf16.mxu0 0
          %1013 = vmatpush1.bf16.msra.mxu0 0
          %1014 = vmatprep.subr.bf16.mxu0 0
          %1015 = vmatpush1.bf16.msra.mxu0 0
          %1016 = vmatprep.subr.bf16.mxu0 0
          %1017 = vmatpush1.bf16.msra.mxu0 0
          %1018 = vmatprep.subr.bf16.mxu0 0
          %1019 = vmatpush1.bf16.msra.mxu0 0
          %1020 = vmatprep.mubr.bf16.mxu0 0
          %1021 = vmatmul.mubr.bf16.gmra.mrb[0].mxu0 %v982
          %v1022 = vpop.f32.mrb[0].mxu0
          %v1023 = vadd.f32 0.0, %v1022
          %v1024 = vpop.f32.mrb[0].mxu0
          %v1025 = vpop.f32.mrb[0].mxu0
          %v1026 = vpop.f32.mrb[0].mxu0
          %1027 = vdwg.mxu0
          %v1028 = vadd.f32 %v979, %v1023
          %1029 = vst.msk [vmem:[#allocation5] sm:$0xff] %vm901, %v1028
          %1030 = vst.msk [vmem:[#allocation3] sm:$0xff] %vm971, %v953
          %v1032 = vunpack.c.l.b16 %v891
          %v1033 = vpack.c.b16 %v1032, %v1032
          %1034 = vrot.lane.b32.xlu0 %v1033, 120
          %v1035 = vpop.permute.xlu0 %1034
          %1037 = vrot.lane.b32.xlu0 %v833, 120
          %v1038 = vpop.permute.xlu0 %1037
          %v1040 = vsel %vm901, %v1035, 0
          %v1043 = vsel %vm901, %v1038, 0
          %1045 = vmatprep.subr.bf16.mxu0 0
          %1046 = vmatpush1.bf16.xpose.msra.mxu0 %v1043
          %1047 = vmatprep.subr.bf16.mxu0 0
          %1048 = vmatpush1.bf16.xpose.msra.mxu0 0
          %1049 = vmatprep.subr.bf16.mxu0 0
          %1050 = vmatpush1.bf16.xpose.msra.mxu0 0
          %1051 = vmatprep.subr.bf16.mxu0 0
          %1052 = vmatpush1.bf16.xpose.msra.mxu0 0
          %1053 = vmatprep.subr.bf16.mxu0 0
          %1054 = vmatpush1.bf16.xpose.msra.mxu0 0
          %1055 = vmatprep.subr.bf16.mxu0 0
          %1056 = vmatpush1.bf16.xpose.msra.mxu0 0
          %1057 = vmatprep.subr.bf16.mxu0 0
          %1058 = vmatpush1.bf16.xpose.msra.mxu0 0
          %1059 = vmatprep.subr.bf16.mxu0 0
          %1060 = vmatpush1.bf16.xpose.msra.mxu0 0
          %1061 = vmatprep.subr.bf16.mxu0 0
          %1062 = vmatpush1.bf16.xpose.msra.mxu0 0
          %1063 = vmatprep.subr.bf16.mxu0 0
          %1064 = vmatpush1.bf16.xpose.msra.mxu0 0
          %1065 = vmatprep.subr.bf16.mxu0 0
          %1066 = vmatpush1.bf16.xpose.msra.mxu0 0
          %1067 = vmatprep.subr.bf16.mxu0 0
          %1068 = vmatpush1.bf16.xpose.msra.mxu0 0
          %1069 = vmatprep.subr.bf16.mxu0 0
          %1070 = vmatpush1.bf16.xpose.msra.mxu0 0
          %1071 = vmatprep.subr.bf16.mxu0 0
          %1072 = vmatpush1.bf16.xpose.msra.mxu0 0
          %1073 = vmatprep.subr.bf16.mxu0 0
          %1074 = vmatpush1.bf16.xpose.msra.mxu0 0
          %1075 = vmatprep.subr.bf16.mxu0 0
          %1076 = vmatpush1.bf16.xpose.msra.mxu0 0
          %1077 = vmatprep.mubr.bf16.mxu0 0
          %1078 = vmatmul.mubr.bf16.gmra.mrb[0].mxu0 %v1040
          %v1079 = vpop.f32.mrb[0].mxu0
          %v1080 = vadd.f32 0.0, %v1079
          %v1081 = vpop.f32.mrb[0].mxu0
          %v1082 = vpop.f32.mrb[0].mxu0
          %v1083 = vpop.f32.mrb[0].mxu0
          %1084 = vdwg.mxu0
          %v1085 = vsel %vm900, -1e+30, %v1080
          %s1086 = scalar_lea.vmem [#allocation3], 8
          %v1087 = vld [vmem:[%s1086] sm:$0xff]
          %v1088 = vsel %vm901, %v1085, -inf
          %1089 = vmax.xlane.f32.xlu0 %v1088
          %v1090 = vpop.xlane.xlu0 %1089
          %v1091 = vmax.f32 %v1087, %v1090
          %v1092 = vsub.f32 %v1087, %v1091
          %v1093 = vmul.f32 %v1092, 1.442695
          %v1094 = vpow.pop %v1093
          %1096 = vset.pattern.permute.xlu0 0
          %1097 = vperm.xlu0 %1096, %v1091
          %v1098 = vpop.permute.xlu0 %1097
          %v1100 = vsub.f32 %v1085, %v1098
          %v1101 = vmul.f32 %v1100, 1.442695
          %v1102 = vpow.pop %v1101
          %s1103 = scalar_lea.vmem [#allocation4], 8
          %v1104 = vld [vmem:[%s1103] sm:$0xff]
          %v1105 = vmul.f32 %v1094, %v1104
          %v1106 = vsel %vm901, %v1102, 0.0
          %1107 = vadd.xlane.f32.xlu0 %v1106
          %v1108 = vpop.xlane.xlu0 %1107
          %v1109 = vadd.f32 %v1105, %v1108
          %1110 = vst.msk [vmem:[%s1103] sm:$0xff] %vm971, %v1109
          %s1111 = scalar_lea.vmem [#allocation5], 8
          %v1112 = vld [vmem:[%s1111] sm:$0xff]
          %1114 = vset.pattern.permute.xlu0 0
          %1115 = vperm.xlu0 %1114, %v1094
          %v1116 = vpop.permute.xlu0 %1115
          %v1118 = vmul.f32 %v1116, %v1112
          %v1119 = vpack.c.bf16 %v1102, %v1102
          %1121 = vrot.lane.b32.xlu0 %v890, 120
          %v1122 = vpop.permute.xlu0 %1121
          %v1124 = vsel %vm901, %v1119, 0
          %v1127 = vsel %vm984, %v1122, 0
          %1129 = vmatprep.subr.bf16.mxu0 0
          %1130 = vmatpush1.bf16.msra.mxu0 %v1127
          %1131 = vmatprep.subr.bf16.mxu0 0
          %1132 = vmatpush1.bf16.msra.mxu0 0
          %1133 = vmatprep.subr.bf16.mxu0 0
          %1134 = vmatpush1.bf16.msra.mxu0 0
          %1135 = vmatprep.subr.bf16.mxu0 0
          %1136 = vmatpush1.bf16.msra.mxu0 0
          %1137 = vmatprep.subr.bf16.mxu0 0
          %1138 = vmatpush1.bf16.msra.mxu0 0
          %1139 = vmatprep.subr.bf16.mxu0 0
          %1140 = vmatpush1.bf16.msra.mxu0 0
          %1141 = vmatprep.subr.bf16.mxu0 0
          %1142 = vmatpush1.bf16.msra.mxu0 0
          %1143 = vmatprep.subr.bf16.mxu0 0
          %1144 = vmatpush1.bf16.msra.mxu0 0
          %1145 = vmatprep.subr.bf16.mxu0 0
          %1146 = vmatpush1.bf16.msra.mxu0 0
          %1147 = vmatprep.subr.bf16.mxu0 0
          %1148 = vmatpush1.bf16.msra.mxu0 0
          %1149 = vmatprep.subr.bf16.mxu0 0
          %1150 = vmatpush1.bf16.msra.mxu0 0
          %1151 = vmatprep.subr.bf16.mxu0 0
          %1152 = vmatpush1.bf16.msra.mxu0 0
          %1153 = vmatprep.subr.bf16.mxu0 0
          %1154 = vmatpush1.bf16.msra.mxu0 0
          %1155 = vmatprep.subr.bf16.mxu0 0
          %1156 = vmatpush1.bf16.msra.mxu0 0
          %1157 = vmatprep.subr.bf16.mxu0 0
          %1158 = vmatpush1.bf16.msra.mxu0 0
          %1159 = vmatprep.subr.bf16.mxu0 0
          %1160 = vmatpush1.bf16.msra.mxu0 0
          %1161 = vmatprep.mubr.bf16.mxu0 0
          %1162 = vmatmul.mubr.bf16.gmra.mrb[0].mxu0 %v1124
          %v1163 = vpop.f32.mrb[0].mxu0
          %v1164 = vadd.f32 0.0, %v1163
          %v1165 = vpop.f32.mrb[0].mxu0
          %v1166 = vpop.f32.mrb[0].mxu0
          %v1167 = vpop.f32.mrb[0].mxu0
          %1168 = vdwg.mxu0
          %v1169 = vadd.f32 %v1118, %v1164
          %1170 = vst.msk [vmem:[%s1111] sm:$0xff] %vm901, %v1169
          %1171 = vst.msk [vmem:[%s1086] sm:$0xff] %vm971, %v1091
          %1172 = vrot.lane.b32.xlu0 %v1033, 112
          %v1173 = vpop.permute.xlu0 %1172
          %1174 = vrot.lane.b32.xlu0 %v833, 112
          %v1175 = vpop.permute.xlu0 %1174
          %v1177 = vsel %vm901, %v1173, 0
          %v1180 = vsel %vm901, %v1175, 0
          %1182 = vmatprep.subr.bf16.mxu0 0
          %1183 = vmatpush1.bf16.xpose.msra.mxu0 %v1180
          %1184 = vmatprep.subr.bf16.mxu0 0
          %1185 = vmatpush1.bf16.xpose.msra.mxu0 0
          %1186 = vmatprep.subr.bf16.mxu0 0
          %1187 = vmatpush1.bf16.xpose.msra.mxu0 0
          %1188 = vmatprep.subr.bf16.mxu0 0
          %1189 = vmatpush1.bf16.xpose.msra.mxu0 0
          %1190 = vmatprep.subr.bf16.mxu0 0
          %1191 = vmatpush1.bf16.xpose.msra.mxu0 0
          %1192 = vmatprep.subr.bf16.mxu0 0
          %1193 = vmatpush1.bf16.xpose.msra.mxu0 0
          %1194 = vmatprep.subr.bf16.mxu0 0
          %1195 = vmatpush1.bf16.xpose.msra.mxu0 0
          %1196 = vmatprep.subr.bf16.mxu0 0
          %1197 = vmatpush1.bf16.xpose.msra.mxu0 0
          %1198 = vmatprep.subr.bf16.mxu0 0
          %1199 = vmatpush1.bf16.xpose.msra.mxu0 0
          %1200 = vmatprep.subr.bf16.mxu0 0
          %1201 = vmatpush1.bf16.xpose.msra.mxu0 0
          %1202 = vmatprep.subr.bf16.mxu0 0
          %1203 = vmatpush1.bf16.xpose.msra.mxu0 0
          %1204 = vmatprep.subr.bf16.mxu0 0
          %1205 = vmatpush1.bf16.xpose.msra.mxu0 0
          %1206 = vmatprep.subr.bf16.mxu0 0
          %1207 = vmatpush1.bf16.xpose.msra.mxu0 0
          %1208 = vmatprep.subr.bf16.mxu0 0
          %1209 = vmatpush1.bf16.xpose.msra.mxu0 0
          %1210 = vmatprep.subr.bf16.mxu0 0
          %1211 = vmatpush1.bf16.xpose.msra.mxu0 0
          %1212 = vmatprep.subr.bf16.mxu0 0
          %1213 = vmatpush1.bf16.xpose.msra.mxu0 0
          %1214 = vmatprep.mubr.bf16.mxu0 0
          %1215 = vmatmul.mubr.bf16.gmra.mrb[0].mxu0 %v1177
          %v1216 = vpop.f32.mrb[0].mxu0
          %v1217 = vadd.f32 0.0, %v1216
          %v1218 = vpop.f32.mrb[0].mxu0
          %v1219 = vpop.f32.mrb[0].mxu0
          %v1220 = vpop.f32.mrb[0].mxu0
          %1221 = vdwg.mxu0
          %v1222 = vsel %vm900, -1e+30, %v1217
          %s1223 = scalar_lea.vmem [#allocation3], 16
          %v1224 = vld [vmem:[%s1223] sm:$0xff]
          %v1225 = vsel %vm901, %v1222, -inf
          %1226 = vmax.xlane.f32.xlu0 %v1225
          %v1227 = vpop.xlane.xlu0 %1226
          %v1228 = vmax.f32 %v1224, %v1227
          %v1229 = vsub.f32 %v1224, %v1228
          %v1230 = vmul.f32 %v1229, 1.442695
          %v1231 = vpow.pop %v1230
          %1233 = vset.pattern.permute.xlu0 0
          %1234 = vperm.xlu0 %1233, %v1228
          %v1235 = vpop.permute.xlu0 %1234
          %v1237 = vsub.f32 %v1222, %v1235
          %v1238 = vmul.f32 %v1237, 1.442695
          %v1239 = vpow.pop %v1238
          %s1240 = scalar_lea.vmem [#allocation4], 16
          %v1241 = vld [vmem:[%s1240] sm:$0xff]
          %v1242 = vmul.f32 %v1231, %v1241
          %v1243 = vsel %vm901, %v1239, 0.0
          %1244 = vadd.xlane.f32.xlu0 %v1243
          %v1245 = vpop.xlane.xlu0 %1244
          %v1246 = vadd.f32 %v1242, %v1245
          %1247 = vst.msk [vmem:[%s1240] sm:$0xff] %vm971, %v1246
          %s1248 = scalar_lea.vmem [#allocation5], 16
          %v1249 = vld [vmem:[%s1248] sm:$0xff]
          %1251 = vset.pattern.permute.xlu0 0
          %1252 = vperm.xlu0 %1251, %v1231
          %v1253 = vpop.permute.xlu0 %1252
          %v1255 = vmul.f32 %v1253, %v1249
          %v1256 = vpack.c.bf16 %v1239, %v1239
          %1257 = vrot.lane.b32.xlu0 %v890, 112
          %v1258 = vpop.permute.xlu0 %1257
          %v1260 = vsel %vm901, %v1256, 0
          %v1263 = vsel %vm984, %v1258, 0
          %1265 = vmatprep.subr.bf16.mxu0 0
          %1266 = vmatpush1.bf16.msra.mxu0 %v1263
          %1267 = vmatprep.subr.bf16.mxu0 0
          %1268 = vmatpush1.bf16.msra.mxu0 0
          %1269 = vmatprep.subr.bf16.mxu0 0
          %1270 = vmatpush1.bf16.msra.mxu0 0
          %1271 = vmatprep.subr.bf16.mxu0 0
          %1272 = vmatpush1.bf16.msra.mxu0 0
          %1273 = vmatprep.subr.bf16.mxu0 0
          %1274 = vmatpush1.bf16.msra.mxu0 0
          %1275 = vmatprep.subr.bf16.mxu0 0
          %1276 = vmatpush1.bf16.msra.mxu0 0
          %1277 = vmatprep.subr.bf16.mxu0 0
          %1278 = vmatpush1.bf16.msra.mxu0 0
          %1279 = vmatprep.subr.bf16.mxu0 0
          %1280 = vmatpush1.bf16.msra.mxu0 0
          %1281 = vmatprep.subr.bf16.mxu0 0
          %1282 = vmatpush1.bf16.msra.mxu0 0
          %1283 = vmatprep.subr.bf16.mxu0 0
          %1284 = vmatpush1.bf16.msra.mxu0 0
          %1285 = vmatprep.subr.bf16.mxu0 0
          %1286 = vmatpush1.bf16.msra.mxu0 0
          %1287 = vmatprep.subr.bf16.mxu0 0
          %1288 = vmatpush1.bf16.msra.mxu0 0
          %1289 = vmatprep.subr.bf16.mxu0 0
          %1290 = vmatpush1.bf16.msra.mxu0 0
          %1291 = vmatprep.subr.bf16.mxu0 0
          %1292 = vmatpush1.bf16.msra.mxu0 0
          %1293 = vmatprep.subr.bf16.mxu0 0
          %1294 = vmatpush1.bf16.msra.mxu0 0
          %1295 = vmatprep.subr.bf16.mxu0 0
          %1296 = vmatpush1.bf16.msra.mxu0 0
          %1297 = vmatprep.mubr.bf16.mxu0 0
          %1298 = vmatmul.mubr.bf16.gmra.mrb[0].mxu0 %v1260
          %v1299 = vpop.f32.mrb[0].mxu0
          %v1300 = vadd.f32 0.0, %v1299
          %v1301 = vpop.f32.mrb[0].mxu0
          %v1302 = vpop.f32.mrb[0].mxu0
          %v1303 = vpop.f32.mrb[0].mxu0
          %1304 = vdwg.mxu0
          %v1305 = vadd.f32 %v1255, %v1300
          %1306 = vst.msk [vmem:[%s1248] sm:$0xff] %vm901, %v1305
          %1307 = vst.msk [vmem:[%s1223] sm:$0xff] %vm971, %v1228
          %1308 = vrot.lane.b32.xlu0 %v1033, 104
          %v1309 = vpop.permute.xlu0 %1308
          %1310 = vrot.lane.b32.xlu0 %v833, 104
          %v1311 = vpop.permute.xlu0 %1310
          %v1313 = vsel %vm901, %v1309, 0
          %v1316 = vsel %vm901, %v1311, 0
          %1318 = vmatprep.subr.bf16.mxu0 0
          %1319 = vmatpush1.bf16.xpose.msra.mxu0 %v1316
          %1320 = vmatprep.subr.bf16.mxu0 0
          %1321 = vmatpush1.bf16.xpose.msra.mxu0 0
          %1322 = vmatprep.subr.bf16.mxu0 0
          %1323 = vmatpush1.bf16.xpose.msra.mxu0 0
          %1324 = vmatprep.subr.bf16.mxu0 0
          %1325 = vmatpush1.bf16.xpose.msra.mxu0 0
          %1326 = vmatprep.subr.bf16.mxu0 0
          %1327 = vmatpush1.bf16.xpose.msra.mxu0 0
          %1328 = vmatprep.subr.bf16.mxu0 0
          %1329 = vmatpush1.bf16.xpose.msra.mxu0 0
          %1330 = vmatprep.subr.bf16.mxu0 0
          %1331 = vmatpush1.bf16.xpose.msra.mxu0 0
          %1332 = vmatprep.subr.bf16.mxu0 0
          %1333 = vmatpush1.bf16.xpose.msra.mxu0 0
          %1334 = vmatprep.subr.bf16.mxu0 0
          %1335 = vmatpush1.bf16.xpose.msra.mxu0 0
          %1336 = vmatprep.subr.bf16.mxu0 0
          %1337 = vmatpush1.bf16.xpose.msra.mxu0 0
          %1338 = vmatprep.subr.bf16.mxu0 0
          %1339 = vmatpush1.bf16.xpose.msra.mxu0 0
          %1340 = vmatprep.subr.bf16.mxu0 0
          %1341 = vmatpush1.bf16.xpose.msra.mxu0 0
          %1342 = vmatprep.subr.bf16.mxu0 0
          %1343 = vmatpush1.bf16.xpose.msra.mxu0 0
          %1344 = vmatprep.subr.bf16.mxu0 0
          %1345 = vmatpush1.bf16.xpose.msra.mxu0 0
          %1346 = vmatprep.subr.bf16.mxu0 0
          %1347 = vmatpush1.bf16.xpose.msra.mxu0 0
          %1348 = vmatprep.subr.bf16.mxu0 0
          %1349 = vmatpush1.bf16.xpose.msra.mxu0 0
          %1350 = vmatprep.mubr.bf16.mxu0 0
          %1351 = vmatmul.mubr.bf16.gmra.mrb[0].mxu0 %v1313
          %v1352 = vpop.f32.mrb[0].mxu0
          %v1353 = vadd.f32 0.0, %v1352
          %v1354 = vpop.f32.mrb[0].mxu0
          %v1355 = vpop.f32.mrb[0].mxu0
          %v1356 = vpop.f32.mrb[0].mxu0
          %1357 = vdwg.mxu0
          %v1358 = vsel %vm900, -1e+30, %v1353
          %s1359 = scalar_lea.vmem [#allocation3], 24
          %v1360 = vld [vmem:[%s1359] sm:$0xff]
          %v1361 = vsel %vm901, %v1358, -inf
          %1362 = vmax.xlane.f32.xlu0 %v1361
          %v1363 = vpop.xlane.xlu0 %1362
          %v1364 = vmax.f32 %v1360, %v1363
          %v1365 = vsub.f32 %v1360, %v1364
          %v1366 = vmul.f32 %v1365, 1.442695
          %v1367 = vpow.pop %v1366
          %1369 = vset.pattern.permute.xlu0 0
          %1370 = vperm.xlu0 %1369, %v1364
          %v1371 = vpop.permute.xlu0 %1370
          %v1373 = vsub.f32 %v1358, %v1371
          %v1374 = vmul.f32 %v1373, 1.442695
          %v1375 = vpow.pop %v1374
          %s1376 = scalar_lea.vmem [#allocation4], 24
          %v1377 = vld [vmem:[%s1376] sm:$0xff]
          %v1378 = vmul.f32 %v1367, %v1377
          %v1379 = vsel %vm901, %v1375, 0.0
          %1380 = vadd.xlane.f32.xlu0 %v1379
          %v1381 = vpop.xlane.xlu0 %1380
          %v1382 = vadd.f32 %v1378, %v1381
          %1383 = vst.msk [vmem:[%s1376] sm:$0xff] %vm971, %v1382
          %s1384 = scalar_lea.vmem [#allocation5], 24
          %v1385 = vld [vmem:[%s1384] sm:$0xff]
          %1387 = vset.pattern.permute.xlu0 0
          %1388 = vperm.xlu0 %1387, %v1367
          %v1389 = vpop.permute.xlu0 %1388
          %v1391 = vmul.f32 %v1389, %v1385
          %v1392 = vpack.c.bf16 %v1375, %v1375
          %1393 = vrot.lane.b32.xlu0 %v890, 104
          %v1394 = vpop.permute.xlu0 %1393
          %v1396 = vsel %vm901, %v1392, 0
          %v1399 = vsel %vm984, %v1394, 0
          %1401 = vmatprep.subr.bf16.mxu0 0
          %1402 = vmatpush1.bf16.msra.mxu0 %v1399
          %1403 = vmatprep.subr.bf16.mxu0 0
          %1404 = vmatpush1.bf16.msra.mxu0 0
          %1405 = vmatprep.subr.bf16.mxu0 0
          %1406 = vmatpush1.bf16.msra.mxu0 0
          %1407 = vmatprep.subr.bf16.mxu0 0
          %1408 = vmatpush1.bf16.msra.mxu0 0
          %1409 = vmatprep.subr.bf16.mxu0 0
          %1410 = vmatpush1.bf16.msra.mxu0 0
          %1411 = vmatprep.subr.bf16.mxu0 0
          %1412 = vmatpush1.bf16.msra.mxu0 0
          %1413 = vmatprep.subr.bf16.mxu0 0
          %1414 = vmatpush1.bf16.msra.mxu0 0
          %1415 = vmatprep.subr.bf16.mxu0 0
          %1416 = vmatpush1.bf16.msra.mxu0 0
          %1417 = vmatprep.subr.bf16.mxu0 0
          %1418 = vmatpush1.bf16.msra.mxu0 0
          %1419 = vmatprep.subr.bf16.mxu0 0
          %1420 = vmatpush1.bf16.msra.mxu0 0
          %1421 = vmatprep.subr.bf16.mxu0 0
          %1422 = vmatpush1.bf16.msra.mxu0 0
          %1423 = vmatprep.subr.bf16.mxu0 0
          %1424 = vmatpush1.bf16.msra.mxu0 0
          %1425 = vmatprep.subr.bf16.mxu0 0
          %1426 = vmatpush1.bf16.msra.mxu0 0
          %1427 = vmatprep.subr.bf16.mxu0 0
          %1428 = vmatpush1.bf16.msra.mxu0 0
          %1429 = vmatprep.subr.bf16.mxu0 0
          %1430 = vmatpush1.bf16.msra.mxu0 0
          %1431 = vmatprep.subr.bf16.mxu0 0
          %1432 = vmatpush1.bf16.msra.mxu0 0
          %1433 = vmatprep.mubr.bf16.mxu0 0
          %1434 = vmatmul.mubr.bf16.gmra.mrb[0].mxu0 %v1396
          %v1435 = vpop.f32.mrb[0].mxu0
          %v1436 = vadd.f32 0.0, %v1435
          %v1437 = vpop.f32.mrb[0].mxu0
          %v1438 = vpop.f32.mrb[0].mxu0
          %v1439 = vpop.f32.mrb[0].mxu0
          %1440 = vdwg.mxu0
          %v1441 = vadd.f32 %v1391, %v1436
          %1442 = vst.msk [vmem:[%s1384] sm:$0xff] %vm901, %v1441
          %1443 = vst.msk [vmem:[%s1359] sm:$0xff] %vm971, %v1364
        $region104: #{tpu_custom_call.1} parent=79 // pred_fallthru
          _
        %p1444 = scmp.eq.s32.totalorder %s39, 1
        // Predicated region
        $region105: #{tpu_custom_call.1} parent=79 // pred_check
          %p1445 = pneg %p1444
        $region106: #{tpu_custom_call.1} parent=79 // pred_check_branch
          %1447 = sbr.rel (%p1445) target = $region108
        $region107: #{tpu_custom_call.1} parent=79 // pred_region
          %v1448 = vld [vmem:[#allocation11] sm:$0xf]
          %v1449 = vld [vmem:[#allocation11 + $0x4] sm:$0xf]
          %v1450 = vld [vmem:[#allocation11 + $0x8] sm:$0xf]
          %v1451 = vld [vmem:[#allocation11 + $0xc] sm:$0xf]
          %v1452 = vld [vmem:[#allocation4] sm:$0xff]
          %v1453 = vrcp.pop %v1452
          %v1454 = vld [vmem:[#allocation5] sm:$0xff]
          %1456 = vset.pattern.permute.xlu0 0
          %1457 = vperm.xlu0 %1456, %v1453
          %v1458 = vpop.permute.xlu0 %1457
          %v1460 = vmul.f32 %v1454, %v1458
          %v1461 = vpack.c.bf16 %v1460, %v1460
          %s1462 = scalar_lea.vmem [#allocation4], 8
          %v1463 = vld [vmem:[%s1462] sm:$0xff]
          %v1464 = vrcp.pop %v1463
          %s1465 = scalar_lea.vmem [#allocation5], 8
          %v1466 = vld [vmem:[%s1465] sm:$0xff]
          %1468 = vset.pattern.permute.xlu0 0
          %1469 = vperm.xlu0 %1468, %v1464
          %v1470 = vpop.permute.xlu0 %1469
          %v1472 = vmul.f32 %v1466, %v1470
          %v1473 = vpack.c.bf16 %v1472, %v1472
          %vm1474 = vcmask 64512
          %v1476 = vsel %vm1474, %v1473, 0
          %vm1478 = vcmask 1043456
          %v1480 = vsel %vm1478, %v1449, 0
          %1482 = vmatprep.subr.bf16.mxu0 0
          %1483 = vmatpush1.bf16.msra.mxu0 %v1480
          %1484 = vmatprep.subr.bf16.mxu0 0
          %1485 = vmatpush1.bf16.msra.mxu0 0
          %1486 = vmatprep.subr.bf16.mxu0 0
          %1487 = vmatpush1.bf16.msra.mxu0 0
          %1488 = vmatprep.subr.bf16.mxu0 0
          %1489 = vmatpush1.bf16.msra.mxu0 0
          %1490 = vmatprep.subr.bf16.mxu0 0
          %1491 = vmatpush1.bf16.msra.mxu0 0
          %1492 = vmatprep.subr.bf16.mxu0 0
          %1493 = vmatpush1.bf16.msra.mxu0 0
          %1494 = vmatprep.subr.bf16.mxu0 0
          %1495 = vmatpush1.bf16.msra.mxu0 0
          %1496 = vmatprep.subr.bf16.mxu0 0
          %1497 = vmatpush1.bf16.msra.mxu0 0
          %1498 = vmatprep.subr.bf16.mxu0 0
          %1499 = vmatpush1.bf16.msra.mxu0 0
          %1500 = vmatprep.subr.bf16.mxu0 0
          %1501 = vmatpush1.bf16.msra.mxu0 0
          %1502 = vmatprep.subr.bf16.mxu0 0
          %1503 = vmatpush1.bf16.msra.mxu0 0
          %1504 = vmatprep.subr.bf16.mxu0 0
          %1505 = vmatpush1.bf16.msra.mxu0 0
          %1506 = vmatprep.subr.bf16.mxu0 0
          %1507 = vmatpush1.bf16.msra.mxu0 0
          %1508 = vmatprep.subr.bf16.mxu0 0
          %1509 = vmatpush1.bf16.msra.mxu0 0
          %1510 = vmatprep.subr.bf16.mxu0 0
          %1511 = vmatpush1.bf16.msra.mxu0 0
          %1512 = vmatprep.subr.bf16.mxu0 0
          %1513 = vmatpush1.bf16.msra.mxu0 0
          %1514 = vmatprep.mubr.bf16.mxu0 0
          %1515 = vmatmul.mubr.bf16.gmra.mrb[0].mxu0 %v1476
          %v1516 = vpop.f32.mrb[0].mxu0
          %v1517 = vadd.f32 0.0, %v1516
          %v1518 = vpop.f32.mrb[0].mxu0
          %v1519 = vpop.f32.mrb[0].mxu0
          %v1520 = vpop.f32.mrb[0].mxu0
          %1521 = vdwg.mxu0
          %v1523 = vsel %vm1474, %v1461, 0
          %v1526 = vsel %vm1478, %v1448, 0
          %1528 = vmatprep.subr.bf16.mxu0 0
          %1529 = vmatpush1.bf16.msra.mxu0 %v1526
          %1530 = vmatprep.subr.bf16.mxu0 0
          %1531 = vmatpush1.bf16.msra.mxu0 0
          %1532 = vmatprep.subr.bf16.mxu0 0
          %1533 = vmatpush1.bf16.msra.mxu0 0
          %1534 = vmatprep.subr.bf16.mxu0 0
          %1535 = vmatpush1.bf16.msra.mxu0 0
          %1536 = vmatprep.subr.bf16.mxu0 0
          %1537 = vmatpush1.bf16.msra.mxu0 0
          %1538 = vmatprep.subr.bf16.mxu0 0
          %1539 = vmatpush1.bf16.msra.mxu0 0
          %1540 = vmatprep.subr.bf16.mxu0 0
          %1541 = vmatpush1.bf16.msra.mxu0 0
          %1542 = vmatprep.subr.bf16.mxu0 0
          %1543 = vmatpush1.bf16.msra.mxu0 0
          %1544 = vmatprep.subr.bf16.mxu0 0
          %1545 = vmatpush1.bf16.msra.mxu0 0
          %1546 = vmatprep.subr.bf16.mxu0 0
          %1547 = vmatpush1.bf16.msra.mxu0 0
          %1548 = vmatprep.subr.bf16.mxu0 0
          %1549 = vmatpush1.bf16.msra.mxu0 0
          %1550 = vmatprep.subr.bf16.mxu0 0
          %1551 = vmatpush1.bf16.msra.mxu0 0
          %1552 = vmatprep.subr.bf16.mxu0 0
          %1553 = vmatpush1.bf16.msra.mxu0 0
          %1554 = vmatprep.subr.bf16.mxu0 0
          %1555 = vmatpush1.bf16.msra.mxu0 0
          %1556 = vmatprep.subr.bf16.mxu0 0
          %1557 = vmatpush1.bf16.msra.mxu0 0
          %1558 = vmatprep.subr.bf16.mxu0 0
          %1559 = vmatpush1.bf16.msra.mxu0 0
          %1560 = vmatprep.mubr.bf16.mxu0 0
          %1561 = vmatmul.mubr.bf16.gmra.mrb[0].mxu0 %v1523
          %v1562 = vpop.f32.mrb[0].mxu0
          %v1563 = vadd.f32 %v1517, %v1562
          %v1564 = vpop.f32.mrb[0].mxu0
          %v1565 = vpop.f32.mrb[0].mxu0
          %v1566 = vpop.f32.mrb[0].mxu0
          %1567 = vdwg.mxu0
          %s1568 = scalar_lea.vmem [#allocation4], 16
          %v1569 = vld [vmem:[%s1568] sm:$0xff]
          %v1570 = vrcp.pop %v1569
          %s1571 = scalar_lea.vmem [#allocation5], 16
          %v1572 = vld [vmem:[%s1571] sm:$0xff]
          %1574 = vset.pattern.permute.xlu0 0
          %1575 = vperm.xlu0 %1574, %v1570
          %v1576 = vpop.permute.xlu0 %1575
          %v1578 = vmul.f32 %v1572, %v1576
          %v1579 = vpack.c.bf16 %v1578, %v1578
          %v1581 = vsel %vm1474, %v1579, 0
          %v1584 = vsel %vm1478, %v1450, 0
          %1586 = vmatprep.subr.bf16.mxu0 0
          %1587 = vmatpush1.bf16.msra.mxu0 %v1584
          %1588 = vmatprep.subr.bf16.mxu0 0
          %1589 = vmatpush1.bf16.msra.mxu0 0
          %1590 = vmatprep.subr.bf16.mxu0 0
          %1591 = vmatpush1.bf16.msra.mxu0 0
          %1592 = vmatprep.subr.bf16.mxu0 0
          %1593 = vmatpush1.bf16.msra.mxu0 0
          %1594 = vmatprep.subr.bf16.mxu0 0
          %1595 = vmatpush1.bf16.msra.mxu0 0
          %1596 = vmatprep.subr.bf16.mxu0 0
          %1597 = vmatpush1.bf16.msra.mxu0 0
          %1598 = vmatprep.subr.bf16.mxu0 0
          %1599 = vmatpush1.bf16.msra.mxu0 0
          %1600 = vmatprep.subr.bf16.mxu0 0
          %1601 = vmatpush1.bf16.msra.mxu0 0
          %1602 = vmatprep.subr.bf16.mxu0 0
          %1603 = vmatpush1.bf16.msra.mxu0 0
          %1604 = vmatprep.subr.bf16.mxu0 0
          %1605 = vmatpush1.bf16.msra.mxu0 0
          %1606 = vmatprep.subr.bf16.mxu0 0
          %1607 = vmatpush1.bf16.msra.mxu0 0
          %1608 = vmatprep.subr.bf16.mxu0 0
          %1609 = vmatpush1.bf16.msra.mxu0 0
          %1610 = vmatprep.subr.bf16.mxu0 0
          %1611 = vmatpush1.bf16.msra.mxu0 0
          %1612 = vmatprep.subr.bf16.mxu0 0
          %1613 = vmatpush1.bf16.msra.mxu0 0
          %1614 = vmatprep.subr.bf16.mxu0 0
          %1615 = vmatpush1.bf16.msra.mxu0 0
          %1616 = vmatprep.subr.bf16.mxu0 0
          %1617 = vmatpush1.bf16.msra.mxu0 0
          %1618 = vmatprep.mubr.bf16.mxu0 0
          %1619 = vmatmul.mubr.bf16.gmra.mrb[0].mxu0 %v1581
          %v1620 = vpop.f32.mrb[0].mxu0
          %v1621 = vadd.f32 0.0, %v1620
          %v1622 = vpop.f32.mrb[0].mxu0
          %v1623 = vpop.f32.mrb[0].mxu0
          %v1624 = vpop.f32.mrb[0].mxu0
          %1625 = vdwg.mxu0
          %v1626 = vadd.f32 %v1563, %v1621
          %s1627 = scalar_lea.vmem [#allocation4], 24
          %v1628 = vld [vmem:[%s1627] sm:$0xff]
          %v1629 = vrcp.pop %v1628
          %s1630 = scalar_lea.vmem [#allocation5], 24
          %v1631 = vld [vmem:[%s1630] sm:$0xff]
          %1633 = vset.pattern.permute.xlu0 0
          %1634 = vperm.xlu0 %1633, %v1629
          %v1635 = vpop.permute.xlu0 %1634
          %v1637 = vmul.f32 %v1631, %v1635
          %v1638 = vpack.c.bf16 %v1637, %v1637
          %v1640 = vsel %vm1474, %v1638, 0
          %v1643 = vsel %vm1478, %v1451, 0
          %1645 = vmatprep.subr.bf16.mxu0 0
          %1646 = vmatpush1.bf16.msra.mxu0 %v1643
          %1647 = vmatprep.subr.bf16.mxu0 0
          %1648 = vmatpush1.bf16.msra.mxu0 0
          %1649 = vmatprep.subr.bf16.mxu0 0
          %1650 = vmatpush1.bf16.msra.mxu0 0
          %1651 = vmatprep.subr.bf16.mxu0 0
          %1652 = vmatpush1.bf16.msra.mxu0 0
          %1653 = vmatprep.subr.bf16.mxu0 0
          %1654 = vmatpush1.bf16.msra.mxu0 0
          %1655 = vmatprep.subr.bf16.mxu0 0
          %1656 = vmatpush1.bf16.msra.mxu0 0
          %1657 = vmatprep.subr.bf16.mxu0 0
          %1658 = vmatpush1.bf16.msra.mxu0 0
          %1659 = vmatprep.subr.bf16.mxu0 0
          %1660 = vmatpush1.bf16.msra.mxu0 0
          %1661 = vmatprep.subr.bf16.mxu0 0
          %1662 = vmatpush1.bf16.msra.mxu0 0
          %1663 = vmatprep.subr.bf16.mxu0 0
          %1664 = vmatpush1.bf16.msra.mxu0 0
          %1665 = vmatprep.subr.bf16.mxu0 0
          %1666 = vmatpush1.bf16.msra.mxu0 0
          %1667 = vmatprep.subr.bf16.mxu0 0
          %1668 = vmatpush1.bf16.msra.mxu0 0
          %1669 = vmatprep.subr.bf16.mxu0 0
          %1670 = vmatpush1.bf16.msra.mxu0 0
          %1671 = vmatprep.subr.bf16.mxu0 0
          %1672 = vmatpush1.bf16.msra.mxu0 0
          %1673 = vmatprep.subr.bf16.mxu0 0
          %1674 = vmatpush1.bf16.msra.mxu0 0
          %1675 = vmatprep.subr.bf16.mxu0 0
          %1676 = vmatpush1.bf16.msra.mxu0 0
          %1677 = vmatprep.mubr.bf16.mxu0 0
          %1678 = vmatmul.mubr.bf16.gmra.mrb[0].mxu0 %v1640
          %v1679 = vpop.f32.mrb[0].mxu0
          %v1680 = vadd.f32 0.0, %v1679
          %v1681 = vpop.f32.mrb[0].mxu0
          %v1682 = vpop.f32.mrb[0].mxu0
          %v1683 = vpop.f32.mrb[0].mxu0
          %1684 = vdwg.mxu0
          %v1685 = vadd.f32 %v1626, %v1680
          %v1686 = vld [vmem:[%s6] sm:$0x1]
          %v1688 = vlaneseq
          %v1689 = vshrl.u32 %v1688, 7
          %v1690 = vsub.s32 0, %v1689
          %v1691 = vrot.slane %v1686, %v1690
          %v1693 = vadd.f32 %v1685, %v1691
          %v1694 = vld [vmem:[%s606] sm:$0xff]
          %v1695 = vadd.f32 %v1694, %v1693
          %v1696 = vld [vmem:[%s13] sm:$0x1]
          %v1697 = vld [vmem:[%s14] sm:$0x1]
          %vm1698 = vcmask 261120
          %v1699 = vsel %vm1698, %v1695, 0.0
          %1700 = vadd.xlane.f32.xlu0 %v1699
          %v1701 = vpop.xlane.xlu0 %1700
          %v1702 = vmul.f32 %v1695, %v1695
          %v1703 = vsel %vm1698, %v1702, 0.0
          %1704 = vadd.xlane.f32.xlu0 %v1703
          %v1705 = vpop.xlane.xlu0 %1704
          %v1706 = vrcp.pop 32.0
          %v1707 = vmul.f32 %v1701, %v1706
          %v1708 = vmul.f32 %v1705, %v1706
          %v1709 = vmul.f32 %v1707, %v1707
          %v1710 = vsub.f32 %v1708, %v1709
          %v1711 = vadd.f32 %v1710, 1e-05
          %v1712 = vrsqrt.pop %v1711
          %v1713 = vsub.f32 %v1695, %v1707
          %v1714 = vmul.f32 %v1713, %v1712
          %v1716 = vlaneseq
          %v1717 = vshrl.u32 %v1716, 7
          %v1718 = vsub.s32 0, %v1717
          %v1719 = vrot.slane %v1696, %v1718
          %v1721 = vmul.f32 %v1714, %v1719
          %v1723 = vlaneseq
          %v1724 = vshrl.u32 %v1723, 7
          %v1725 = vsub.s32 0, %v1724
          %v1726 = vrot.slane %v1697, %v1725
          %v1728 = vadd.f32 %v1721, %v1726
          %v1729 = vpack.c.bf16 %v1728, %v1728
          %v1730 = vld [vmem:[#allocation12] sm:$0xf]
          %v1731 = vld [vmem:[#allocation12 + $0x4] sm:$0xf]
          %v1732 = vld [vmem:[#allocation12 + $0x8] sm:$0xf]
          %v1733 = vld [vmem:[#allocation12 + $0xc] sm:$0xf]
          %v1734 = vld [vmem:[%s8] sm:$0x1]
          %v1736 = vlaneseq
          %v1737 = vshrl.u32 %v1736, 7
          %v1738 = vsub.s32 0, %v1737
          %v1739 = vrot.slane %v1734, %v1738
          %v1745 = vunpack.c.l.b16 %v1730
          %v1746 = vunpack.c.l.b16 %v1731
          %v1747 = vunpack.c.l.b16 %v1732
          %v1748 = vunpack.c.l.b16 %v1733
          %v1749 = vpack.c.b16 %v1746, %v1745
          %v1750 = vpack.c.b16 %v1748, %v1747
          %v1754 = vsel %vm1698, %v1729, 0
          %1756 = vmatprep.subr.bf16.mxu0 0
          %1757 = vmatpush1.bf16.msra.mxu0 %v1749
          %1758 = vmatprep.subr.bf16.mxu0 0
          %1759 = vmatpush1.bf16.msra.mxu0 %v1750
          %1760 = vmatprep.subr.bf16.mxu0 0
          %1761 = vmatpush1.bf16.msra.mxu0 0
          %1762 = vmatprep.subr.bf16.mxu0 0
          %1763 = vmatpush1.bf16.msra.mxu0 0
          %1764 = vmatprep.subr.bf16.mxu0 0
          %1765 = vmatpush1.bf16.msra.mxu0 0
          %1766 = vmatprep.subr.bf16.mxu0 0
          %1767 = vmatpush1.bf16.msra.mxu0 0
          %1768 = vmatprep.subr.bf16.mxu0 0
          %1769 = vmatpush1.bf16.msra.mxu0 0
          %1770 = vmatprep.subr.bf16.mxu0 0
          %1771 = vmatpush1.bf16.msra.mxu0 0
          %1772 = vmatprep.subr.bf16.mxu0 0
          %1773 = vmatpush1.bf16.msra.mxu0 0
          %1774 = vmatprep.subr.bf16.mxu0 0
          %1775 = vmatpush1.bf16.msra.mxu0 0
          %1776 = vmatprep.subr.bf16.mxu0 0
          %1777 = vmatpush1.bf16.msra.mxu0 0
          %1778 = vmatprep.subr.bf16.mxu0 0
          %1779 = vmatpush1.bf16.msra.mxu0 0
          %1780 = vmatprep.subr.bf16.mxu0 0
          %1781 = vmatpush1.bf16.msra.mxu0 0
          %1782 = vmatprep.subr.bf16.mxu0 0
          %1783 = vmatpush1.bf16.msra.mxu0 0
          %1784 = vmatprep.subr.bf16.mxu0 0
          %1785 = vmatpush1.bf16.msra.mxu0 0
          %1786 = vmatprep.subr.bf16.mxu0 0
          %1787 = vmatpush1.bf16.msra.mxu0 0
          %1788 = vmatprep.mubr.bf16.mxu0 0
          %1789 = vmatmul.mubr.bf16.gmra.mrb[0].mxu0 %v1754
          %v1790 = vpop.f32.mrb[0].mxu0
          %v1791 = vadd.f32 %v1739, %v1790
          %v1792 = vpop.f32.mrb[0].mxu0
          %v1793 = vpop.f32.mrb[0].mxu0
          %v1794 = vpop.f32.mrb[0].mxu0
          %1795 = vdwg.mxu0
          %v1796 = vmul.f32 %v1791, 0.5
          %v1797 = vmul.f32 %v1791, 0.044715
          %v1798 = vmul.f32 %v1797, %v1791
          %v1799 = vmul.f32 %v1798, %v1791
          %v1800 = vadd.f32 %v1791, %v1799
          %v1801 = vmul.f32 %v1800, 0.7978846
          %v1802 = vtanh.pop %v1801
          %v1803 = vadd.f32 %v1802, 1.0
          %v1804 = vmul.f32 %v1796, %v1803
          %v1805 = vpack.c.bf16 %v1804, %v1804
          %v1806 = vld [vmem:[%s9] sm:$0xf]
          %v1807 = vld [vmem:[%s9 + $0x4] sm:$0xf]
          %v1808 = vld [vmem:[%s9 + $0x8] sm:$0xf]
          %v1809 = vld [vmem:[%s9 + $0xc] sm:$0xf]
          %v1810 = vld [vmem:[%s9 + $0x10] sm:$0xf]
          %v1811 = vld [vmem:[%s9 + $0x14] sm:$0xf]
          %v1812 = vld [vmem:[%s9 + $0x18] sm:$0xf]
          %v1813 = vld [vmem:[%s9 + $0x1c] sm:$0xf]
          %v1814 = vld [vmem:[%s9 + $0x20] sm:$0xf]
          %v1815 = vld [vmem:[%s9 + $0x24] sm:$0xf]
          %v1816 = vld [vmem:[%s9 + $0x28] sm:$0xf]
          %v1817 = vld [vmem:[%s9 + $0x2c] sm:$0xf]
          %v1818 = vld [vmem:[%s9 + $0x30] sm:$0xf]
          %v1819 = vld [vmem:[%s9 + $0x34] sm:$0xf]
          %v1820 = vld [vmem:[%s9 + $0x38] sm:$0xf]
          %v1821 = vld [vmem:[%s9 + $0x3c] sm:$0xf]
          %v1822 = vld [vmem:[%s10] sm:$0x1]
          %v1824 = vlaneseq
          %v1825 = vshrl.u32 %v1824, 7
          %v1826 = vsub.s32 0, %v1825
          %v1827 = vrot.slane %v1822, %v1826
          %v1845 = vunpack.c.l.b16 %v1806
          %v1846 = vunpack.c.l.b16 %v1807
          %v1847 = vunpack.c.l.b16 %v1808
          %v1848 = vunpack.c.l.b16 %v1809
          %v1849 = vunpack.c.l.b16 %v1810
          %v1850 = vunpack.c.l.b16 %v1811
          %v1851 = vunpack.c.l.b16 %v1812
          %v1852 = vunpack.c.l.b16 %v1813
          %v1853 = vunpack.c.l.b16 %v1814
          %v1854 = vunpack.c.l.b16 %v1815
          %v1855 = vunpack.c.l.b16 %v1816
          %v1856 = vunpack.c.l.b16 %v1817
          %v1857 = vunpack.c.l.b16 %v1818
          %v1858 = vunpack.c.l.b16 %v1819
          %v1859 = vunpack.c.l.b16 %v1820
          %v1860 = vunpack.c.l.b16 %v1821
          %v1861 = vpack.c.b16 %v1846, %v1845
          %v1862 = vpack.c.b16 %v1848, %v1847
          %v1863 = vpack.c.b16 %v1850, %v1849
          %v1864 = vpack.c.b16 %v1852, %v1851
          %v1865 = vpack.c.b16 %v1854, %v1853
          %v1866 = vpack.c.b16 %v1856, %v1855
          %v1867 = vpack.c.b16 %v1858, %v1857
          %v1868 = vpack.c.b16 %v1860, %v1859
          %1877 = vmatprep.subr.bf16.mxu0 0
          %1878 = vmatpush1.bf16.msra.mxu0 %v1861
          %1879 = vmatprep.subr.bf16.mxu0 0
          %1880 = vmatpush1.bf16.msra.mxu0 %v1862
          %1881 = vmatprep.subr.bf16.mxu0 0
          %1882 = vmatpush1.bf16.msra.mxu0 %v1863
          %1883 = vmatprep.subr.bf16.mxu0 0
          %1884 = vmatpush1.bf16.msra.mxu0 %v1864
          %1885 = vmatprep.subr.bf16.mxu0 0
          %1886 = vmatpush1.bf16.msra.mxu0 %v1865
          %1887 = vmatprep.subr.bf16.mxu0 0
          %1888 = vmatpush1.bf16.msra.mxu0 %v1866
          %1889 = vmatprep.subr.bf16.mxu0 0
          %1890 = vmatpush1.bf16.msra.mxu0 %v1867
          %1891 = vmatprep.subr.bf16.mxu0 0
          %1892 = vmatpush1.bf16.msra.mxu0 %v1868
          %1893 = vmatprep.subr.bf16.mxu0 0
          %1894 = vmatpush1.bf16.msra.mxu0 0
          %1895 = vmatprep.subr.bf16.mxu0 0
          %1896 = vmatpush1.bf16.msra.mxu0 0
          %1897 = vmatprep.subr.bf16.mxu0 0
          %1898 = vmatpush1.bf16.msra.mxu0 0
          %1899 = vmatprep.subr.bf16.mxu0 0
          %1900 = vmatpush1.bf16.msra.mxu0 0
          %1901 = vmatprep.subr.bf16.mxu0 0
          %1902 = vmatpush1.bf16.msra.mxu0 0
          %1903 = vmatprep.subr.bf16.mxu0 0
          %1904 = vmatpush1.bf16.msra.mxu0 0
          %1905 = vmatprep.subr.bf16.mxu0 0
          %1906 = vmatpush1.bf16.msra.mxu0 0
          %1907 = vmatprep.subr.bf16.mxu0 0
          %1908 = vmatpush1.bf16.msra.mxu0 0
          %1909 = vmatprep.mubr.bf16.mxu0 0
          %1910 = vmatmul.mubr.bf16.gmra.mrb[0].mxu0 %v1805
          %v1911 = vpop.f32.mrb[0].mxu0
          %v1912 = vadd.f32 %v1827, %v1911
          %v1913 = vpop.f32.mrb[0].mxu0
          %v1914 = vpop.f32.mrb[0].mxu0
          %v1915 = vpop.f32.mrb[0].mxu0
          %1916 = vdwg.mxu0
          %v1917 = vadd.f32 %v1695, %v1912
          %1918 = vst.msk [vmem:[%s598] sm:$0xff] %vm1698, %v1917
        $region108: #{tpu_custom_call.1} parent=79 // pred_fallthru
          _
        %s1919 = sand.u32 %s390, 1
        %s1920 = scalar_lea.sflag [#allocation8], %s1919
        %s1921 = sand.u32 %s390, 1
        %s1922 = smul.addr %s1921, 8
        %s1923 = scalar_lea.vmem [#allocation14], %s1922
        // Predicated region
        $region109: #{tpu_custom_call.1} parent=79 // pred_check
          %p1924 = pneg %p400
        $region110: #{tpu_custom_call.1} parent=79 // pred_check_branch
          %1926 = sbr.rel (%p1924) target = $region112
        $region111: #{tpu_custom_call.1} parent=79 // pred_region
          %s1928 = ssub.s32 128, 128
          %1929 = vsyncadd %s1920, %s1928
          %s1930 = smul.addr %s37, 2
          %s1931 = sadd.s32 %s38, %s1930
          %s1932 = smul.addr %s1931, 128
          %s1933 = scalar_lea.hbm %s15, %s1932
          %s1935 = sshll.u32 %s1923, 4
          %s1936 = int_to_ptr.vmem [resolvable:$true] %s1935
          %1938 = dma.vmem_to_hbm [thread:$0]  %s1936, 128, %s1933, %s1920
        $region112: #{tpu_custom_call.1} parent=79 // pred_fallthru
          _
      $region80: #{tpu_custom_call.1} parent=5 // pred_fallthru
        _
      %p1939 = scmp.le.s32.totalorder 2, %s27
      // Predicated region
      $region113: #{tpu_custom_call.1} parent=5 // pred_check
        %p1940 = pneg %p1939
      $region114: #{tpu_custom_call.1} parent=5 // pred_check_branch
        %1942 = sbr.rel (%p1940) target = $region116
      $region115: #{tpu_custom_call.1} parent=5 // pred_region
        %s1943 = ssub.s32 %s27, 2
        // Predicated region
        $region117: #{tpu_custom_call.1} parent=115 // pred_check
          %p1944 = pneg %p406
        $region118: #{tpu_custom_call.1} parent=115 // pred_check_branch
          %1946 = sbr.rel (%p1944) target = $region120
        $region119: #{tpu_custom_call.1} parent=115 // pred_region
          %s1947 = sand.u32 %s391, 1
          %s1948 = scalar_lea.sflag [#allocation8], %s1947
          %s1949 = sand.u32 %s391, 1
          %s1950 = smul.addr %s1949, 8
          %s1951 = scalar_lea.vmem [#allocation14], %s1950
          %1952 = dma.done %s1948, 128
        $region120: #{tpu_custom_call.1} parent=115 // pred_fallthru
          _
      $region116: #{tpu_custom_call.1} parent=5 // pred_fallthru
        _
    $region6: #{tpu_custom_call.1} parent=1 // loop_footer
      %s31 = sadd.s32 1, %s27
    $region7: #{tpu_custom_call.1} parent=1 // loop_footer_branch
      %26 = sbr.rel target = $region3
    $region8: #{tpu_custom_call.1} parent=1 // loop_exit
      _
    %1953 = vsyncpa [#allocation7], 1
    %s1954 = scalar_lea.sflag [#allocation7], 1
    %1955 = vsyncpa %s1954, 1
    %1956 = vsyncpa [#allocation10], 1
    %1957 = vsyncpa [#allocation13], 1
    %1958 = vsyncpa [#allocation8], 1
    %s1959 = scalar_lea.sflag [#allocation8], 1
    %1960 = vsyncpa %s1959, 1

</llo_original>
